<compile_context>
chip_gen: v7x
topology: tpu7x:2x2x1
jax: 0.10.0
libtpu: 0.0.40
codegen_flags: <defaults>
</compile_context>

<pallas_src>
import functools

import jax
import jax.numpy as jnp
from jax import lax
from jax.experimental import pallas as pl
from jax.experimental.pallas import tpu as pltpu


def _round_up(v, m):
    return (v + m - 1) // m * m


# ----------------------------------------------------------------------------
# Conv (3x3, stride 2, pad 1) + bias + ReLU  == one synthetic backbone level.
# ----------------------------------------------------------------------------
def _conv_kernel(x_ref, w_ref, b_ref, valid_ref, o_ref, *, TM, WOP, Coutp):
    """One (image, output-row tile) per grid step.

    x_ref     : (1, 1, RT, C4)   bf16  phase-grid slab tile (RT = TM + WOP halo)
    w_ref     : (2, C4, 2*Coutp) bf16  [dp] x [cell chan] x [A (dq=0) | B (dq=1)]
    b_ref     : (1, Coutp)       f32   bias row (zero in padded channels)
    valid_ref : (TM, 1)          f32   1.0 inside the true Ho x Wo window
    o_ref     : (1, TM, Coutp)   bf16  flattened (row-in-tile, channel) output
    """
    x0 = x_ref[0, 0, 0:TM, :]             # phase row i   (aligned slice)
    x1 = x_ref[0, 0, WOP:WOP + TM, :]     # phase row i+1 (aligned slice)
    # One K contraction per dp tap; A (dq=0) and B (dq=1) share the MXU pass
    # by being packed along the output lane axis.
    ab = (jnp.dot(x0, w_ref[0], preferred_element_type=jnp.float32) +
          jnp.dot(x1, w_ref[1], preferred_element_type=jnp.float32))
    a_half = ab[:, :Coutp]
    b_half = ab[:, Coutp:]
    # out[i, j] = A[i, j] + B[i, j + 1]: shift the f32 B half up by one row.
    # (Row TM-1 of the shift lands on a padded column -> zeroed by the mask.)
    b_shift = jnp.concatenate(
        [b_half[1:TM, :], jnp.zeros((1, Coutp), jnp.float32)], axis=0)
    acc = jnp.maximum(a_half + b_shift + b_ref[...], 0.0)
    # Zero padded rows/cols so the padded layout can feed the next level as-is.
    acc = acc * valid_ref[...]
    o_ref[0] = acc.astype(o_ref.dtype)


def conv3x3s2_relu_level(x_stored, true_hw, cin, w_ab, b_row, *,
                         target_rows=512):
    """3x3 conv, stride 2, pad 1, + bias + ReLU on the true (H, W, cin) window
    of a possibly padded NHWC tensor.

    x_stored : (N, Hs, Ws, Cs) float/bf16, real content in [:H, :W, :cin]
    w_ab     : (2, 4*cin, 2*Coutp) bf16 packed weights (see _pack_conv_weights)
    b_row    : (1, Coutp) f32
    Returns (y, Ho, Wo) with y : (N, Ho_pad, WOP, Coutp) bf16, exactly zero
    outside the true Ho x Wo x Cout window, ready to flow into the next level.
    """
    N = x_stored.shape[0]
    H, W = true_hw
    Ho, Wo = (H + 1) // 2, (W + 1) // 2
    WOP = _round_up(Wo + 1, 16)                   # >= Wo+1, bf16 sublane aligned
    TILE_I = max(1, min(Ho, target_rows // WOP))  # output image rows per step
    Ho_pad = _round_up(Ho, TILE_I)
    nT = Ho_pad // TILE_I
    TM = TILE_I * WOP                             # output rows per grid step
    RT = (TILE_I + 1) * WOP                       # + one halo phase row
    C4 = 4 * cin
    Coutp = w_ab.shape[-1] // 2

    # --- space-to-depth into the phase-grid slab (one fused pass under jit;
    #     the [:H, :W, :cin] de-pad of the previous level folds in here) ------
    xb = x_stored[:, :H, :W, :cin].astype(jnp.bfloat16)
    xp = jnp.pad(xb, ((0, 0),
                      (1, 2 * (Ho_pad + 1) - H - 1),
                      (1, 2 * WOP - W - 1),
                      (0, 0)))
    cells = xp.reshape(N, Ho_pad + 1, 2, WOP, 2, cin)
    cells = cells.transpose(0, 1, 3, 2, 4, 5).reshape(N, Ho_pad + 1, WOP, C4)
    # Per-row-tile view with its own +1 phase-row halo (~1/TILE_I extra bytes)
    # so plain Blocked BlockSpecs keep the automatic double-buffered pipeline.
    # TODO(synk): for very large images, switch to memory_space=pl.ANY + a
    # manual halo DMA to avoid even this small duplication.
    if nT == 1:
        slab = cells[:, None]
    else:
        slab = jnp.stack(
            [cells[:, t * TILE_I:t * TILE_I + TILE_I + 1] for t in range(nT)],
            axis=1)
    slab = slab.reshape(N, nT, RT, C4)

    # 1.0 inside the true Ho x Wo window, per flattened output row.
    ii = jnp.arange(Ho_pad, dtype=jnp.int32)[:, None]
    jj = jnp.arange(WOP, dtype=jnp.int32)[None, :]
    valid = ((ii < Ho) & (jj < Wo)).astype(jnp.float32).reshape(Ho_pad * WOP, 1)

    kernel = functools.partial(_conv_kernel, TM=TM, WOP=WOP, Coutp=Coutp)
    y = pl.pallas_call(
        kernel,
        out_shape=jax.ShapeDtypeStruct((N, Ho_pad * WOP, Coutp), jnp.bfloat16),
        grid_spec=pltpu.PrefetchScalarGridSpec(
            num_scalar_prefetch=0,
            grid=(N, nT),
            in_specs=[
                pl.BlockSpec((1, 1, RT, C4), lambda n, t: (n, t, 0, 0)),
                # TODO(synk): pipeline_mode=pl.Buffered(1) on the two constant
                # operands below would drop their redundant second VMEM buffer.
                pl.BlockSpec((2, C4, 2 * Coutp), lambda n, t: (0, 0, 0)),
                pl.BlockSpec((1, Coutp), lambda n, t: (0, 0)),
                pl.BlockSpec((TM, 1), lambda n, t: (t, 0)),
            ],
            out_specs=pl.BlockSpec((1, TM, Coutp), lambda n, t: (n, t, 0)),
        ),
        compiler_params=pltpu.CompilerParams(
            dimension_semantics=("parallel", "parallel"),
            vmem_limit_bytes=32 * 1024 * 1024),
    )(slab, w_ab, b_row, valid)
    return y.reshape(N, Ho_pad, WOP, Coutp), Ho, Wo


def _pack_conv_weights(w_pt, b, coutp):
    """(Cout, Cin, 3, 3) PyTorch conv weights -> (2, 4*Cin, 2*coutp) bf16.

    Row layout of each dp slice: space-to-depth cell channel (a, b, cin), cin
    fastest; column layout: [A taps (dq=0) | B taps (dq=1)], each zero-padded
    to coutp lanes (so padded output channels are exactly zero)."""
    cout, cin = int(w_pt.shape[0]), int(w_pt.shape[1])
    w_t = jnp.transpose(w_pt, (2, 3, 1, 0)).astype(jnp.float32)  # (kh,kw,ci,co)
    w_ab = jnp.zeros((2, 4 * cin, 2 * coutp), jnp.float32)
    for kh in range(3):
        dp, a = divmod(kh, 2)
        for kw in range(3):
            dq, bb = divmod(kw, 2)
            r0 = a * 2 * cin + bb * cin
            c0 = dq * coutp
            w_ab = w_ab.at[dp, r0:r0 + cin, c0:c0 + cout].set(w_t[kh, kw])
    b_row = jnp.zeros((1, coutp), jnp.float32).at[0, :cout].set(
        b.astype(jnp.float32))
    return w_ab.astype(jnp.bfloat16), b_row


# ----------------------------------------------------------------------------
# mask_out_padding: True on padded region, False inside ceil(h/s) x ceil(w/s).
# Plain fused JAX per perf review (not worth a pallas_call launch).
# ----------------------------------------------------------------------------
def mask_out_padding(image_sizes, Hf, Wf, stride):
    hlim = (image_sizes[:, 0] + stride - 1) // stride
    wlim = (image_sizes[:, 1] + stride - 1) // stride
    rows = jnp.arange(Hf, dtype=jnp.int32)[None, :, None]
    cols = jnp.arange(Wf, dtype=jnp.int32)[None, None, :]
    return (rows >= hlim[:, None, None]) | (cols >= wlim[:, None, None])


# ----------------------------------------------------------------------------
# MaskedBackbone
# ----------------------------------------------------------------------------
class MaskedBackbonePallas:
    """Thin wrapper around a (synthetic) backbone that also emits padding masks."""

    # TODO(synk): build_backbone(cfg) is a full Detectron2 ResNet/FPN; it is
    # replaced by a deterministic stack of stride-2 3x3 conv+ReLU levels so the
    # feature-pyramid / stride / padding-mask semantics of forward() are kept.
    def __init__(self, in_channels=4, level_channels=(8, 8),
                 key=jax.random.PRNGKey(0)):
        self.params = []
        self.packed = []
        self.feature_strides = []
        cin = in_channels
        stride = 1
        keys = jax.random.split(key, 2 * len(level_channels))
        for i, cout in enumerate(level_channels):
            w = 0.1 * jax.random.normal(keys[2 * i], (cout, cin, 3, 3),
                                        jnp.float32)
            b = 0.01 * jax.random.normal(keys[2 * i + 1], (cout,), jnp.float32)
            self.params.append((w, b))
            # Packed once, eagerly, at init (never re-packed inside the jit).
            # TODO(synk): on v6e/v7x with real channel counts (>=256), round
            # Coutp to 256 to fill the 2x256x256 MXU; 128 matches v5e.
            coutp = _round_up(cout, 128)
            self.packed.append(_pack_conv_weights(w, b, coutp) + (cout,))
            stride *= 2
            self.feature_strides.append(stride)
            cin = cout
        self.num_channels = level_channels[-1]
        self._fwd = jax.jit(self._forward)

    def _forward(self, images_nchw, image_sizes):
        x = jnp.transpose(images_nchw, (0, 2, 3, 1))          # NHWC throughout
        H, W, cin = (images_nchw.shape[2], images_nchw.shape[3],
                     images_nchw.shape[1])
        out = {}
        for i, (w_ab, b_row, cout) in enumerate(self.packed):
            y, Ho, Wo = conv3x3s2_relu_level(x, (H, W), cin, w_ab, b_row)
            # API boundary: de-pad + f32 upcast + NCHW in one fused copy.
            feat = jnp.transpose(
                y[:, :Ho, :Wo, :cout].astype(jnp.float32), (0, 3, 1, 2))
            mask = mask_out_padding(image_sizes, Ho, Wo,
                                    self.feature_strides[i])
            out[f"p{i + 2}"] = (feat, mask)
            # Padded bf16 layout flows straight into the next level's s2d.
            x, H, W, cin = y, Ho, Wo, cout
        return out

    def __call__(self, images_nchw, image_sizes):
        """
        images_nchw : (N, C, H, W) float32 padded batch (ImageList.tensor)
        image_sizes : (N, 2) int32 per-image (h, w) before padding
        Returns dict level -> (features NCHW f32, bool padding mask (N,Hf,Wf)),
        the analogue of {k: NestedTensor(feature, mask)}.
        """
        return self._fwd(images_nchw, image_sizes)


if __name__ == "__main__":
    key = jax.random.PRNGKey(0)
    k_img, k_model = jax.random.split(key)

    N, C, H, W = 2, 4, 16, 16
    images = jax.random.normal(k_img, (N, C, H, W), jnp.float32)
    sizes = [(13, 16), (16, 10)]                       # per-image (h, w)
    image_sizes = jnp.array(sizes, dtype=jnp.int32)

    model = MaskedBackbonePallas(in_channels=C, level_channels=(8, 8),
                                 key=k_model)
    features = model(images, image_sizes)

    # Numerical check against an XLA reference (bf16-matmul tolerance),
    # chained level by level from the Pallas outputs.
    x_in = jnp.transpose(images, (0, 2, 3, 1))
    for i, (w, b) in enumerate(model.params):
        y_ref = lax.conv_general_dilated(
            x_in, jnp.transpose(w, (2, 3, 1, 0)), (2, 2), ((1, 1), (1, 1)),
            dimension_numbers=("NHWC", "HWIO", "NHWC"))
        y_ref = jnp.maximum(y_ref + b[None, None, None, :], 0.0)

        feat, mask = features[f"p{i + 2}"]
        assert feat.dtype == jnp.float32 and mask.dtype == jnp.bool_
        feat_nhwc = jnp.transpose(feat, (0, 2, 3, 1))
        assert feat_nhwc.shape == y_ref.shape, (feat_nhwc.shape, y_ref.shape)
        err = float(jnp.max(jnp.abs(feat_nhwc - y_ref)))
        assert err < 8e-2, f"level {i} conv mismatch: {err}"

        s = model.feature_strides[i]
        Hf, Wf = feat.shape[2], feat.shape[3]
        assert mask.shape == (N, Hf, Wf)
        m_ref = jnp.ones((N, Hf, Wf), jnp.bool_)
        for n, (h_, w_) in enumerate(sizes):
            m_ref = m_ref.at[n, :-(-h_ // s), :-(-w_ // s)].set(False)
        assert bool(jnp.all(mask == m_ref)), f"level {i} mask mismatch"

        x_in = feat_nhwc                               # chain from Pallas output

    jax.block_until_ready(features)
    print("KERNEL_OK")
</pallas_src>

<mosaic_0001>
module attributes {stable_mosaic.version = 11 : i64} {
  func.func @_conv_kernel(%arg0: i32, %arg1: i32, %arg2: memref<1x1x144x16xbf16, #tpu.memory_space<vmem>>, %arg3: memref<2x16x256xbf16, #tpu.memory_space<vmem>>, %arg4: memref<1x128xf32, #tpu.memory_space<vmem>>, %arg5: memref<128x1xf32, #tpu.memory_space<vmem>>, %arg6: memref<1x128x128xbf16, #tpu.memory_space<vmem>>) attributes {dimension_semantics = [#tpu.dimension_semantics<parallel>, #tpu.dimension_semantics<parallel>], iteration_bounds = array<i64: 2, 1>, scalar_prefetch = 0 : i64, scratch_operands = 0 : i64, tpu.core_type = #tpu.core_type<tc>, window_params = [{transform_indices = @transform_0, window_bounds = array<i64: 1, 1, 144, 16>}, {pipeline_mode = #tpu.pipeline_mode<synchronous>, transform_indices = @transform_1, window_bounds = array<i64: 2, 16, 256>}, {pipeline_mode = #tpu.pipeline_mode<synchronous>, transform_indices = @transform_2, window_bounds = array<i64: 1, 128>}, {transform_indices = @transform_3, window_bounds = array<i64: 128, 1>}, {transform_indices = @transform_4, window_bounds = array<i64: 1, 128, 128>}]} {
    %c0 = arith.constant 0 : index
    %c0_0 = arith.constant 0 : index
    %c0_1 = arith.constant 0 : index
    %c0_2 = arith.constant 0 : index
    %0 = vector.load %arg2[%c0, %c0_0, %c0_1, %c0_2] : memref<1x1x144x16xbf16, #tpu.memory_space<vmem>>, vector<1x1x128x16xbf16>
    %1 = vector.shape_cast %0 : vector<1x1x128x16xbf16> to vector<128x16xbf16>
    %c0_3 = arith.constant 0 : index
    %c0_4 = arith.constant 0 : index
    %c16 = arith.constant 16 : index
    %c0_5 = arith.constant 0 : index
    %2 = vector.load %arg2[%c0_3, %c0_4, %c16, %c0_5] : memref<1x1x144x16xbf16, #tpu.memory_space<vmem>>, vector<1x1x128x16xbf16>
    %3 = vector.shape_cast %2 : vector<1x1x128x16xbf16> to vector<128x16xbf16>
    %c0_6 = arith.constant 0 : index
    %c0_7 = arith.constant 0 : index
    %c0_8 = arith.constant 0 : index
    %4 = vector.load %arg3[%c0_6, %c0_7, %c0_8] : memref<2x16x256xbf16, #tpu.memory_space<vmem>>, vector<1x16x256xbf16>
    %5 = vector.shape_cast %4 : vector<1x16x256xbf16> to vector<16x256xbf16>
    %cst = arith.constant dense<0.000000e+00> : vector<128x256xf32>
    %6 = tpu.matmul %1, %5, %cst {dimension_numbers = #tpu.dot_dimension_numbers<[1], [0], [0], [1], [0, 0, 1, 1], [], []>} : vector<128x16xbf16>, vector<16x256xbf16>, vector<128x256xf32> -> vector<128x256xf32>
    %c1 = arith.constant 1 : index
    %c0_9 = arith.constant 0 : index
    %c0_10 = arith.constant 0 : index
    %7 = vector.load %arg3[%c1, %c0_9, %c0_10] : memref<2x16x256xbf16, #tpu.memory_space<vmem>>, vector<1x16x256xbf16>
    %8 = vector.shape_cast %7 : vector<1x16x256xbf16> to vector<16x256xbf16>
    %cst_11 = arith.constant dense<0.000000e+00> : vector<128x256xf32>
    %9 = tpu.matmul %3, %8, %cst_11 {dimension_numbers = #tpu.dot_dimension_numbers<[1], [0], [0], [1], [0, 0, 1, 1], [], []>} : vector<128x16xbf16>, vector<16x256xbf16>, vector<128x256xf32> -> vector<128x256xf32>
    %10 = arith.addf %6, %9 : vector<128x256xf32>
    %11 = vector.extract_strided_slice %10 {offsets = [0, 0], sizes = [128, 128], strides = [1, 1]} : vector<128x256xf32> to vector<128x128xf32>
    %12 = vector.extract_strided_slice %10 {offsets = [0, 128], sizes = [128, 128], strides = [1, 1]} : vector<128x256xf32> to vector<128x128xf32>
    %13 = vector.extract_strided_slice %12 {offsets = [1, 0], sizes = [127, 128], strides = [1, 1]} : vector<128x128xf32> to vector<127x128xf32>
    %cst_12 = arith.constant 0.000000e+00 : f32
    %14 = vector.broadcast %cst_12 : f32 to vector<1x128xf32>
    %15 = tpu.concatenate %13, %14 in 0 : vector<127x128xf32>, vector<1x128xf32> -> vector<128x128xf32>
    %16 = arith.addf %11, %15 : vector<128x128xf32>
    %c0_13 = arith.constant 0 : index
    %c0_14 = arith.constant 0 : index
    %17 = vector.load %arg4[%c0_13, %c0_14] : memref<1x128xf32, #tpu.memory_space<vmem>>, vector<1x128xf32>
    %18 = vector.broadcast %17 : vector<1x128xf32> to vector<128x128xf32>
    %19 = arith.addf %16, %18 : vector<128x128xf32>
    %cst_15 = arith.constant 0.000000e+00 : f32
    %20 = vector.broadcast %cst_15 : f32 to vector<128x128xf32>
    %21 = arith.maximumf %19, %20 : vector<128x128xf32>
    %c0_16 = arith.constant 0 : index
    %c0_17 = arith.constant 0 : index
    %22 = vector.load %arg5[%c0_16, %c0_17] : memref<128x1xf32, #tpu.memory_space<vmem>>, vector<128x1xf32>
    %23 = vector.broadcast %22 : vector<128x1xf32> to vector<128x128xf32>
    %24 = arith.mulf %21, %23 : vector<128x128xf32>
    %25 = arith.truncf %24 : vector<128x128xf32> to vector<128x128xbf16>
    %c0_18 = arith.constant 0 : index
    %c0_19 = arith.constant 0 : index
    %c0_20 = arith.constant 0 : index
    %26 = vector.load %arg6[%c0_18, %c0_19, %c0_20] : memref<1x128x128xbf16, #tpu.memory_space<vmem>>, vector<1x128x128xbf16>
    %27 = vector.shape_cast %26 : vector<1x128x128xbf16> to vector<128x128xbf16>
    %28 = vector.shape_cast %25 : vector<128x128xbf16> to vector<1x128x128xbf16>
    tpu.vector_store %arg6[%c0_18, %c0_19, %c0_20], %28 {strides = array<i32>} : memref<1x128x128xbf16, #tpu.memory_space<vmem>>, vector<1x128x128xbf16>,
    return
  }
  func.func @transform_0(%arg0: i32, %arg1: i32) -> (i32, i32, i32, i32) {
    %c0_i32 = arith.constant 0 : i32
    %c0_i32_0 = arith.constant 0 : i32
    %c0_i32_1 = arith.constant 0 : i32
    return %arg0, %arg1, %c0_i32, %c0_i32_0 : i32, i32, i32, i32
  }
  func.func @transform_1(%arg0: i32, %arg1: i32) -> (i32, i32, i32) {
    %c0_i32 = arith.constant 0 : i32
    %c0_i32_0 = arith.constant 0 : i32
    %c0_i32_1 = arith.constant 0 : i32
    %c0_i32_2 = arith.constant 0 : i32
    return %c0_i32, %c0_i32_0, %c0_i32_1 : i32, i32, i32
  }
  func.func @transform_2(%arg0: i32, %arg1: i32) -> (i32, i32) {
    %c0_i32 = arith.constant 0 : i32
    %c0_i32_0 = arith.constant 0 : i32
    %c0_i32_1 = arith.constant 0 : i32
    return %c0_i32, %c0_i32_0 : i32, i32
  }
  func.func @transform_3(%arg0: i32, %arg1: i32) -> (i32, i32) {
    %c0_i32 = arith.constant 0 : i32
    %c0_i32_0 = arith.constant 0 : i32
    return %arg1, %c0_i32 : i32, i32
  }
  func.func @transform_4(%arg0: i32, %arg1: i32) -> (i32, i32, i32) {
    %c0_i32 = arith.constant 0 : i32
    %c0_i32_0 = arith.constant 0 : i32
    return %arg0, %arg1, %c0_i32 : i32, i32, i32
  }
}

module attributes {stable_mosaic.version = 11 : i64} {
  func.func @_conv_kernel(%arg0: i32, %arg1: i32, %arg2: memref<1x1x80x32xbf16, #tpu.memory_space<vmem>>, %arg3: memref<2x32x256xbf16, #tpu.memory_space<vmem>>, %arg4: memref<1x128xf32, #tpu.memory_space<vmem>>, %arg5: memref<64x1xf32, #tpu.memory_space<vmem>>, %arg6: memref<1x64x128xbf16, #tpu.memory_space<vmem>>) attributes {dimension_semantics = [#tpu.dimension_semantics<parallel>, #tpu.dimension_semantics<parallel>], iteration_bounds = array<i64: 2, 1>, scalar_prefetch = 0 : i64, scratch_operands = 0 : i64, tpu.core_type = #tpu.core_type<tc>, window_params = [{transform_indices = @transform_0, window_bounds = array<i64: 1, 1, 80, 32>}, {pipeline_mode = #tpu.pipeline_mode<synchronous>, transform_indices = @transform_1, window_bounds = array<i64: 2, 32, 256>}, {pipeline_mode = #tpu.pipeline_mode<synchronous>, transform_indices = @transform_2, window_bounds = array<i64: 1, 128>}, {transform_indices = @transform_3, window_bounds = array<i64: 64, 1>}, {transform_indices = @transform_4, window_bounds = array<i64: 1, 64, 128>}]} {
    %c0 = arith.constant 0 : index
    %c0_0 = arith.constant 0 : index
    %c0_1 = arith.constant 0 : index
    %c0_2 = arith.constant 0 : index
    %0 = vector.load %arg2[%c0, %c0_0, %c0_1, %c0_2] : memref<1x1x80x32xbf16, #tpu.memory_space<vmem>>, vector<1x1x64x32xbf16>
    %1 = vector.shape_cast %0 : vector<1x1x64x32xbf16> to vector<64x32xbf16>
    %c0_3 = arith.constant 0 : index
    %c0_4 = arith.constant 0 : index
    %c16 = arith.constant 16 : index
    %c0_5 = arith.constant 0 : index
    %2 = vector.load %arg2[%c0_3, %c0_4, %c16, %c0_5] : memref<1x1x80x32xbf16, #tpu.memory_space<vmem>>, vector<1x1x64x32xbf16>
    %3 = vector.shape_cast %2 : vector<1x1x64x32xbf16> to vector<64x32xbf16>
    %c0_6 = arith.constant 0 : index
    %c0_7 = arith.constant 0 : index
    %c0_8 = arith.constant 0 : index
    %4 = vector.load %arg3[%c0_6, %c0_7, %c0_8] : memref<2x32x256xbf16, #tpu.memory_space<vmem>>, vector<1x32x256xbf16>
    %5 = vector.shape_cast %4 : vector<1x32x256xbf16> to vector<32x256xbf16>
    %cst = arith.constant dense<0.000000e+00> : vector<64x256xf32>
    %6 = tpu.matmul %1, %5, %cst {dimension_numbers = #tpu.dot_dimension_numbers<[1], [0], [0], [1], [0, 0, 1, 1], [], []>} : vector<64x32xbf16>, vector<32x256xbf16>, vector<64x256xf32> -> vector<64x256xf32>
    %c1 = arith.constant 1 : index
    %c0_9 = arith.constant 0 : index
    %c0_10 = arith.constant 0 : index
    %7 = vector.load %arg3[%c1, %c0_9, %c0_10] : memref<2x32x256xbf16, #tpu.memory_space<vmem>>, vector<1x32x256xbf16>
    %8 = vector.shape_cast %7 : vector<1x32x256xbf16> to vector<32x256xbf16>
    %cst_11 = arith.constant dense<0.000000e+00> : vector<64x256xf32>
    %9 = tpu.matmul %3, %8, %cst_11 {dimension_numbers = #tpu.dot_dimension_numbers<[1], [0], [0], [1], [0, 0, 1, 1], [], []>} : vector<64x32xbf16>, vector<32x256xbf16>, vector<64x256xf32> -> vector<64x256xf32>
    %10 = arith.addf %6, %9 : vector<64x256xf32>
    %11 = vector.extract_strided_slice %10 {offsets = [0, 0], sizes = [64, 128], strides = [1, 1]} : vector<64x256xf32> to vector<64x128xf32>
    %12 = vector.extract_strided_slice %10 {offsets = [0, 128], sizes = [64, 128], strides = [1, 1]} : vector<64x256xf32> to vector<64x128xf32>
    %13 = vector.extract_strided_slice %12 {offsets = [1, 0], sizes = [63, 128], strides = [1, 1]} : vector<64x128xf32> to vector<63x128xf32>
    %cst_12 = arith.constant 0.000000e+00 : f32
    %14 = vector.broadcast %cst_12 : f32 to vector<1x128xf32>
    %15 = tpu.concatenate %13, %14 in 0 : vector<63x128xf32>, vector<1x128xf32> -> vector<64x128xf32>
    %16 = arith.addf %11, %15 : vector<64x128xf32>
    %c0_13 = arith.constant 0 : index
    %c0_14 = arith.constant 0 : index
    %17 = vector.load %arg4[%c0_13, %c0_14] : memref<1x128xf32, #tpu.memory_space<vmem>>, vector<1x128xf32>
    %18 = vector.broadcast %17 : vector<1x128xf32> to vector<64x128xf32>
    %19 = arith.addf %16, %18 : vector<64x128xf32>
    %cst_15 = arith.constant 0.000000e+00 : f32
    %20 = vector.broadcast %cst_15 : f32 to vector<64x128xf32>
    %21 = arith.maximumf %19, %20 : vector<64x128xf32>
    %c0_16 = arith.constant 0 : index
    %c0_17 = arith.constant 0 : index
    %22 = vector.load %arg5[%c0_16, %c0_17] : memref<64x1xf32, #tpu.memory_space<vmem>>, vector<64x1xf32>
    %23 = vector.broadcast %22 : vector<64x1xf32> to vector<64x128xf32>
    %24 = arith.mulf %21, %23 : vector<64x128xf32>
    %25 = arith.truncf %24 : vector<64x128xf32> to vector<64x128xbf16>
    %c0_18 = arith.constant 0 : index
    %c0_19 = arith.constant 0 : index
    %c0_20 = arith.constant 0 : index
    %26 = vector.load %arg6[%c0_18, %c0_19, %c0_20] : memref<1x64x128xbf16, #tpu.memory_space<vmem>>, vector<1x64x128xbf16>
    %27 = vector.shape_cast %26 : vector<1x64x128xbf16> to vector<64x128xbf16>
    %28 = vector.shape_cast %25 : vector<64x128xbf16> to vector<1x64x128xbf16>
    tpu.vector_store %arg6[%c0_18, %c0_19, %c0_20], %28 {strides = array<i32>} : memref<1x64x128xbf16, #tpu.memory_space<vmem>>, vector<1x64x128xbf16>,
    return
  }
  func.func @transform_0(%arg0: i32, %arg1: i32) -> (i32, i32, i32, i32) {
    %c0_i32 = arith.constant 0 : i32
    %c0_i32_0 = arith.constant 0 : i32
    %c0_i32_1 = arith.constant 0 : i32
    return %arg0, %arg1, %c0_i32, %c0_i32_0 : i32, i32, i32, i32
  }
  func.func @transform_1(%arg0: i32, %arg1: i32) -> (i32, i32, i32) {
    %c0_i32 = arith.constant 0 : i32
    %c0_i32_0 = arith.constant 0 : i32
    %c0_i32_1 = arith.constant 0 : i32
    %c0_i32_2 = arith.constant 0 : i32
    return %c0_i32, %c0_i32_0, %c0_i32_1 : i32, i32, i32
  }
  func.func @transform_2(%arg0: i32, %arg1: i32) -> (i32, i32) {
    %c0_i32 = arith.constant 0 : i32
    %c0_i32_0 = arith.constant 0 : i32
    %c0_i32_1 = arith.constant 0 : i32
    return %c0_i32, %c0_i32_0 : i32, i32
  }
  func.func @transform_3(%arg0: i32, %arg1: i32) -> (i32, i32) {
    %c0_i32 = arith.constant 0 : i32
    %c0_i32_0 = arith.constant 0 : i32
    return %arg1, %c0_i32 : i32, i32
  }
  func.func @transform_4(%arg0: i32, %arg1: i32) -> (i32, i32, i32) {
    %c0_i32 = arith.constant 0 : i32
    %c0_i32_0 = arith.constant 0 : i32
    return %arg0, %arg1, %c0_i32 : i32, i32, i32
  }
}

</mosaic_0001>

<llo_original>
// kernel: _forward.2
$region0: #{_forward.2}
  #allocation0 [shape = 'u32[]', space=smem, size = 0x4, offset = 0x4, fixed_abs, tag = 'smem constant byte address 0x4 - core index']
  #allocation1 [shape = 'u32[144,128]{1,0:T(1,128)}', space=vmem, size = 0x12000, scoped, tag = 'internal scratch']
  %s0 = inlined_call_operand.vmem [shape: bf16[2,1,144,16], index: 0, kind: input, shape index: {}]
  %s1 = inlined_call_operand.vmem [shape: bf16[2,16,256], index: 1, kind: input, shape index: {}]
  %s2 = inlined_call_operand.vmem [shape: f32[1,128], index: 2, kind: input, shape index: {}]
  %s3 = inlined_call_operand.vmem [shape: f32[128,1], index: 3, kind: input, shape index: {}]
  %s4 = inlined_call_operand.vmem [shape: bf16[2,128,128], index: 4, kind: output, shape index: {}]
  %s5 = sld [smem:[#allocation0]]
  $region49: #{_forward.2} parent=0
    _
  %s7 = ssub.s32 1, %s5
  %s8 = scalar_select 0, %s7, %s5
  loop: start=0, step=1, limit=4
  $region2: #{_forward.2} parent=0 // loop_pre_header
    _
  $region3: #{_forward.2} parent=0 // loop_header
    %s10 = sphi 0, %s14
    %p11 = scmp.ge.s32.totalorder %s10, 4
    %s17 = sphi 0, %s29
    %s18 = sphi 0, %s25
    %s19 = sphi 0, %s17
    %s20 = sphi 0, %s18
    %s21 = sphi 0, %s19
    %s22 = sphi 0, %s20
    %s34 = sphi 0, %s36
    %s37 = sphi 0, %s34
    %s38 = sphi 0, %s37
    %s54 = sphi 0, %s38
    %s58 = sphi 0, %s58
    %s60 = sphi 0, %s58
    %s61 = sphi 0, %s60
    %s75 = sphi 0, %s61
    %s79 = sphi 0, %s79
    %s81 = sphi 0, %s79
    %s82 = sphi 0, %s81
    %s96 = sphi 0, %s82
    %s102 = sphi 0, %s104
    %s105 = sphi 0, %s102
    %s106 = sphi 0, %s105
    %s122 = sphi 0, %s106
    %s130 = sphi 0, %s132
    %s133 = sphi 0, %s130
    %s134 = sphi 0, %s133
    %s150 = sphi 0, %s134
  $region4: #{_forward.2} parent=0 // loop_header_branch
    %13 = sbr.rel (%p11) target = $region8
  $region5: #{_forward.2} parent=0 // loop_body
    %s15 = ssub.s32 %s10, 1
    %s16 = ssub.s32 %s10, 2
    %s23 = sadd.s32 1, %s18
    %p24 = scmp.ge.s32.totalorder %s23, 1
    %s25 = scalar_select %p24, 0, %s23
    %s26 = sadd.s32 1, %s17
    %s27 = scalar_select %p24, %s26, %s17
    %p28 = scmp.ge.s32.totalorder %s27, 2
    %s29 = scalar_select %p28, 0, %s27
    %s30 = ssub.s32 %s17, %s29
    %s31 = ssub.s32 %s18, %s25
    %s32 = sor.u32 %s30, %s31
    %p33 = scmp.eq.s32.totalorder %s32, 0
    %s35 = sadd.s32 %s34, 1
    %s36 = scalar_select %p33, %s34, %s35
    %p39 = pneg %p33
    %p40 = scmp.eq.s32.totalorder %s10, 1
    %p41 = por %p39, %p40
    %p42 = scmp.ne.s32.totalorder %s34, %s37
    %p43 = scmp.eq.s32.totalorder %s10, 0
    %p44 = por %p42, %p43
    %p45 = scmp.ne.s32.totalorder %s34, %s37
    %p46 = scmp.eq.s32.totalorder %s15, 1
    %p47 = por %p45, %p46
    %p48 = scmp.ne.s32.totalorder %s37, %s38
    %p49 = scmp.eq.s32.totalorder %s15, 0
    %p50 = por %p48, %p49
    %p51 = scmp.ne.s32.totalorder %s37, %s38
    %p52 = scmp.eq.s32.totalorder %s16, 1
    %p53 = por %p51, %p52
    %p55 = scmp.ne.s32.totalorder %s38, %s54
    %p56 = scmp.eq.s32.totalorder %s16, 0
    %p57 = por %p55, %p56
    %s59 = sadd.s32 %s58, 1
    %p62 = scmp.eq.s32.totalorder %s10, 1
    %p63 = scmp.ne.s32.totalorder %s58, %s60
    %p64 = scmp.eq.s32.totalorder %s10, 0
    %p65 = por %p63, %p64
    %p66 = scmp.ne.s32.totalorder %s58, %s60
    %p67 = scmp.eq.s32.totalorder %s15, 1
    %p68 = por %p66, %p67
    %p69 = scmp.ne.s32.totalorder %s60, %s61
    %p70 = scmp.eq.s32.totalorder %s15, 0
    %p71 = por %p69, %p70
    %p72 = scmp.ne.s32.totalorder %s60, %s61
    %p73 = scmp.eq.s32.totalorder %s16, 1
    %p74 = por %p72, %p73
    %p76 = scmp.ne.s32.totalorder %s61, %s75
    %p77 = scmp.eq.s32.totalorder %s16, 0
    %p78 = por %p76, %p77
    %s80 = sadd.s32 %s79, 1
    %p83 = scmp.eq.s32.totalorder %s10, 1
    %p84 = scmp.ne.s32.totalorder %s79, %s81
    %p85 = scmp.eq.s32.totalorder %s10, 0
    %p86 = por %p84, %p85
    %p87 = scmp.ne.s32.totalorder %s79, %s81
    %p88 = scmp.eq.s32.totalorder %s15, 1
    %p89 = por %p87, %p88
    %p90 = scmp.ne.s32.totalorder %s81, %s82
    %p91 = scmp.eq.s32.totalorder %s15, 0
    %p92 = por %p90, %p91
    %p93 = scmp.ne.s32.totalorder %s81, %s82
    %p94 = scmp.eq.s32.totalorder %s16, 1
    %p95 = por %p93, %p94
    %p97 = scmp.ne.s32.totalorder %s82, %s96
    %p98 = scmp.eq.s32.totalorder %s16, 0
    %p99 = por %p97, %p98
    %s100 = ssub.s32 %s18, %s25
    %p101 = scmp.eq.s32.totalorder %s100, 0
    %s103 = sadd.s32 %s102, 1
    %s104 = scalar_select %p101, %s102, %s103
    %p107 = pneg %p101
    %p108 = scmp.eq.s32.totalorder %s10, 1
    %p109 = por %p107, %p108
    %p110 = scmp.ne.s32.totalorder %s102, %s105
    %p111 = scmp.eq.s32.totalorder %s10, 0
    %p112 = por %p110, %p111
    %p113 = scmp.ne.s32.totalorder %s102, %s105
    %p114 = scmp.eq.s32.totalorder %s15, 1
    %p115 = por %p113, %p114
    %p116 = scmp.ne.s32.totalorder %s105, %s106
    %p117 = scmp.eq.s32.totalorder %s15, 0
    %p118 = por %p116, %p117
    %p119 = scmp.ne.s32.totalorder %s105, %s106
    %p120 = scmp.eq.s32.totalorder %s16, 1
    %p121 = por %p119, %p120
    %p123 = scmp.ne.s32.totalorder %s106, %s122
    %p124 = scmp.eq.s32.totalorder %s16, 0
    %p125 = por %p123, %p124
    %s126 = ssub.s32 %s17, %s29
    %s127 = ssub.s32 %s18, %s25
    %s128 = sor.u32 %s126, %s127
    %p129 = scmp.eq.s32.totalorder %s128, 0
    %s131 = sadd.s32 %s130, 1
    %s132 = scalar_select %p129, %s130, %s131
    %p135 = pneg %p129
    %p136 = scmp.eq.s32.totalorder %s10, 1
    %p137 = por %p135, %p136
    %p138 = scmp.ne.s32.totalorder %s130, %s133
    %p139 = scmp.eq.s32.totalorder %s10, 0
    %p140 = por %p138, %p139
    %p141 = scmp.ne.s32.totalorder %s130, %s133
    %p142 = scmp.eq.s32.totalorder %s15, 1
    %p143 = por %p141, %p142
    %p144 = scmp.ne.s32.totalorder %s133, %s134
    %p145 = scmp.eq.s32.totalorder %s15, 0
    %p146 = por %p144, %p145
    %p147 = scmp.ne.s32.totalorder %s133, %s134
    %p148 = scmp.eq.s32.totalorder %s16, 1
    %p149 = por %p147, %p148
    %p151 = scmp.ne.s32.totalorder %s134, %s150
    %p152 = scmp.eq.s32.totalorder %s16, 0
    %p153 = por %p151, %p152
    %p154 = scmp.le.s32.totalorder 1, %s10
    %p155 = scmp.lt.s32.totalorder %s10, 3
    %p156 = pnand %p154, %p155
    %p157 = pneg %p156
    // Predicated region
    $region9: #{_forward.2} parent=5 // pred_check
      _
    $region10: #{_forward.2} parent=5 // pred_check_branch
      %159 = sbr.rel (%p156) target = $region12
    $region11: #{_forward.2} parent=5 // pred_region
      %s160 = ssub.s32 %s10, 1
      // Predicated region
      $region13: #{_forward.2} parent=11 // pred_check
        %p161 = pneg %p71
      $region14: #{_forward.2} parent=11 // pred_check_branch
        %163 = sbr.rel (%p161) target = $region16
      $region15: #{_forward.2} parent=11 // pred_region
        _
      $region16: #{_forward.2} parent=11 // pred_fallthru
        _
      // Predicated region
      $region17: #{_forward.2} parent=11 // pred_check
        %p164 = pneg %p92
      $region18: #{_forward.2} parent=11 // pred_check_branch
        %166 = sbr.rel (%p164) target = $region20
      $region19: #{_forward.2} parent=11 // pred_region
        _
      $region20: #{_forward.2} parent=11 // pred_fallthru
        _
      // Predicated region
      $region21: #{_forward.2} parent=11 // pred_check
        %p167 = pneg %p118
      $region22: #{_forward.2} parent=11 // pred_check_branch
        %169 = sbr.rel (%p167) target = $region24
      $region23: #{_forward.2} parent=11 // pred_region
        %s170 = smul.u32 16, %s20
        %p171 = scmp.lt.s32.totalorder %s170, 15
        %s172 = scalar_select %p171, %s170, 15
        %s173 = smul.addr %s172, 8
        %s174 = scalar_lea.vmem %s3, %s173
        %s175 = smul.u32 16, %s20
      $region24: #{_forward.2} parent=11 // pred_fallthru
        _
    $region12: #{_forward.2} parent=5 // pred_fallthru
      _
    %p176 = scmp.lt.s32.totalorder %s10, 2
    // Predicated region
    $region25: #{_forward.2} parent=5 // pred_check
      %p177 = pneg %p176
    $region26: #{_forward.2} parent=5 // pred_check_branch
      %179 = sbr.rel (%p177) target = $region28
    $region27: #{_forward.2} parent=5 // pred_region
      // Predicated region
      $region29: #{_forward.2} parent=27 // pred_check
        %p180 = pneg %p44
      $region30: #{_forward.2} parent=27 // pred_check_branch
        %182 = sbr.rel (%p180) target = $region32
      $region31: #{_forward.2} parent=27 // pred_region
        %p183 = scmp.lt.s32.totalorder %s17, 1
        %s184 = scalar_select %p183, %s17, 1
        %p185 = scmp.lt.s32.totalorder %s18, 0
        %s186 = scalar_select %p185, %s18, 0
        %s187 = smul.addr %s186, 18
        %s188 = smul.addr %s184, 18
        %s189 = sadd.s32 %s187, %s188
        %s190 = smul.addr %s189, 4
        %s191 = scalar_lea.vmem %s0, %s190
      $region32: #{_forward.2} parent=27 // pred_fallthru
        _
    $region28: #{_forward.2} parent=5 // pred_fallthru
      _
    %p192 = scmp.le.s32.totalorder 1, %s10
    %p193 = scmp.lt.s32.totalorder %s10, 3
    %p194 = pnand %p192, %p193
    %p195 = pneg %p194
    // Predicated region
    $region33: #{_forward.2} parent=5 // pred_check
      _
    $region34: #{_forward.2} parent=5 // pred_check_branch
      %197 = sbr.rel (%p194) target = $region36
    $region35: #{_forward.2} parent=5 // pred_region
      %s198 = ssub.s32 %s10, 1
      %p199 = scmp.lt.s32.totalorder %s19, 1
      %s200 = scalar_select %p199, %s19, 1
      %p201 = scmp.lt.s32.totalorder %s20, 0
      %s202 = scalar_select %p201, %s20, 0
      %s203 = smul.addr %s202, 18
      %s204 = smul.addr %s200, 18
      %s205 = sadd.s32 %s203, %s204
      %s206 = smul.addr %s205, 4
      %s207 = scalar_lea.vmem %s0, %s206
      %p208 = pneg %p50
      %p209 = pneg %p47
      %p210 = pneg %p71
      %p211 = pneg %p68
      %p212 = pneg %p92
      %p213 = pneg %p89
      %s214 = smul.u32 16, %s20
      %p215 = scmp.lt.s32.totalorder %s214, 15
      %s216 = scalar_select %p215, %s214, 15
      %s217 = smul.addr %s216, 8
      %s218 = scalar_lea.vmem %s3, %s217
      %p219 = pneg %p118
      %p220 = pneg %p115
      %p221 = pneg %p146
      %p222 = pneg %p143
      %s223 = smul.u32 16, %s20
      %p224 = scmp.lt.s32.totalorder %s19, 1
      %s225 = scalar_select %p224, %s19, 1
      %p226 = scmp.lt.s32.totalorder %s223, 15
      %s227 = scalar_select %p226, %s223, 15
      %s228 = smul.addr %s225, 16
      %s229 = sadd.s32 %s227, %s228
      %s230 = smul.addr %s229, 4
      %s231 = scalar_lea.vmem %s4, %s230
      %p232 = scmp.lt.s32.totalorder %s19, 1
      %s233 = scalar_select %p232, %s19, 1
      %p234 = scmp.lt.s32.totalorder %s20, 0
      %s235 = scalar_select %p234, %s20, 0
      %s236 = smul.addr %s235, 18
      %s237 = smul.addr %s233, 18
      %s238 = sadd.s32 %s236, %s237
      %s239 = smul.addr %s238, 4
      %s240 = scalar_lea.vmem %s0, %s239
      %s241 = smul.u32 16, %s20
      %p242 = scmp.lt.s32.totalorder %s241, 15
      %s243 = scalar_select %p242, %s241, 15
      %s244 = smul.addr %s243, 8
      %s245 = scalar_lea.vmem %s3, %s244
      %s246 = smul.u32 16, %s20
      %s247 = smul.u32 16, %s20
      %p248 = scmp.lt.s32.totalorder %s19, 1
      %s249 = scalar_select %p248, %s19, 1
      %p250 = scmp.lt.s32.totalorder %s247, 15
      %s251 = scalar_select %p250, %s247, 15
      %s252 = smul.addr %s249, 16
      %s253 = sadd.s32 %s251, %s252
      %s254 = smul.addr %s253, 4
      %s255 = scalar_lea.vmem %s4, %s254
      %s256 = smul.u32 16, %s20
      %v258 = vld [vmem:[%s240] sm:$0xf]
      %v259 = vld [vmem:[%s240 + $0x4] sm:$0xf]
      %v260 = vld [vmem:[%s240 + $0x8] sm:$0xf]
      %v261 = vld [vmem:[%s240 + $0xc] sm:$0xf]
      %v262 = vld [vmem:[%s240 + $0x10] sm:$0xf]
      %v263 = vld [vmem:[%s240 + $0x14] sm:$0xf]
      %v264 = vld [vmem:[%s240 + $0x18] sm:$0xf]
      %v265 = vld [vmem:[%s240 + $0x1c] sm:$0xf]
      %v266 = vld [vmem:[%s240 + $0x20] sm:$0xf]
      %v267 = vld [vmem:[%s240 + $0x24] sm:$0xf]
      %v268 = vld [vmem:[%s240 + $0x28] sm:$0xf]
      %v269 = vld [vmem:[%s240 + $0x2c] sm:$0xf]
      %v270 = vld [vmem:[%s240 + $0x30] sm:$0xf]
      %v271 = vld [vmem:[%s240 + $0x34] sm:$0xf]
      %v272 = vld [vmem:[%s240 + $0x38] sm:$0xf]
      %v273 = vld [vmem:[%s240 + $0x3c] sm:$0xf]
      %v274 = vld [vmem:[%s240 + $0x40] sm:$0xf]
      %v275 = vld [vmem:[%s240 + $0x44] sm:$0xf]
      %v276 = vld [vmem:[%s1] sm:$0xff]
      %v277 = vld [vmem:[%s1 + $0x8] sm:$0xff]
      %s278 = scalar_lea.vmem %s1, 16
      %v279 = vld [vmem:[%s278] sm:$0xff]
      %v280 = vld [vmem:[%s278 + $0x8] sm:$0xff]
      %v297 = vunpack.c.l.b16 %v260
      %v298 = vunpack.c.l.b16 %v261
      %v299 = vunpack.c.l.b16 %v262
      %v300 = vunpack.c.l.b16 %v263
      %v301 = vunpack.c.l.b16 %v264
      %v302 = vunpack.c.l.b16 %v265
      %v303 = vunpack.c.l.b16 %v266
      %v304 = vunpack.c.l.b16 %v267
      %v305 = vunpack.c.l.b16 %v268
      %v306 = vunpack.c.l.b16 %v269
      %v307 = vunpack.c.l.b16 %v270
      %v308 = vunpack.c.l.b16 %v271
      %v309 = vunpack.c.l.b16 %v272
      %v310 = vunpack.c.l.b16 %v273
      %v311 = vunpack.c.l.b16 %v274
      %v312 = vunpack.c.l.b16 %v275
      %v313 = vpack.c.b16 %v298, %v297
      %v314 = vpack.c.b16 %v300, %v299
      %v315 = vpack.c.b16 %v302, %v301
      %v316 = vpack.c.b16 %v304, %v303
      %v317 = vpack.c.b16 %v306, %v305
      %v318 = vpack.c.b16 %v308, %v307
      %v319 = vpack.c.b16 %v310, %v309
      %v320 = vpack.c.b16 %v312, %v311
      %v323 = vunpack.c.l.b16 %v279
      %v324 = vunpack.c.h.b16 %v279
      %v325 = vunpack.c.l.b16 %v280
      %v326 = vunpack.c.h.b16 %v280
      %v327 = vpack.c.b16 %v325, %v323
      %v328 = vpack.c.b16 %v326, %v324
      %vm331 = vcmask 130048
      %v333 = vsel %vm331, %v313, 0
      %v336 = vsel %vm331, %v314, 0
      %v339 = vsel %vm331, %v315, 0
      %v342 = vsel %vm331, %v316, 0
      %v345 = vsel %vm331, %v317, 0
      %v348 = vsel %vm331, %v318, 0
      %v351 = vsel %vm331, %v319, 0
      %v354 = vsel %vm331, %v320, 0
      %356 = vmatprep.subr.bf16.mxu0 %v328
      %357 = vmatpush1.bf16.msra.mxu0 %v327
      %358 = vmatprep.subr.bf16.mxu0 0
      %359 = vmatpush1.bf16.msra.mxu0 0
      %360 = vmatprep.subr.bf16.mxu0 0
      %361 = vmatpush1.bf16.msra.mxu0 0
      %362 = vmatprep.subr.bf16.mxu0 0
      %363 = vmatpush1.bf16.msra.mxu0 0
      %364 = vmatprep.subr.bf16.mxu0 0
      %365 = vmatpush1.bf16.msra.mxu0 0
      %366 = vmatprep.subr.bf16.mxu0 0
      %367 = vmatpush1.bf16.msra.mxu0 0
      %368 = vmatprep.subr.bf16.mxu0 0
      %369 = vmatpush1.bf16.msra.mxu0 0
      %370 = vmatprep.subr.bf16.mxu0 0
      %371 = vmatpush1.bf16.msra.mxu0 0
      %372 = vmatprep.subr.bf16.mxu0 0
      %373 = vmatpush1.bf16.msra.mxu0 0
      %374 = vmatprep.subr.bf16.mxu0 0
      %375 = vmatpush1.bf16.msra.mxu0 0
      %376 = vmatprep.subr.bf16.mxu0 0
      %377 = vmatpush1.bf16.msra.mxu0 0
      %378 = vmatprep.subr.bf16.mxu0 0
      %379 = vmatpush1.bf16.msra.mxu0 0
      %380 = vmatprep.subr.bf16.mxu0 0
      %381 = vmatpush1.bf16.msra.mxu0 0
      %382 = vmatprep.subr.bf16.mxu0 0
      %383 = vmatpush1.bf16.msra.mxu0 0
      %384 = vmatprep.subr.bf16.mxu0 0
      %385 = vmatpush1.bf16.msra.mxu0 0
      %386 = vmatprep.subr.bf16.mxu0 0
      %387 = vmatpush1.bf16.msra.mxu0 0
      %388 = vmatprep.mubr.bf16.mxu0 0
      %389 = vmatmul.mubr.bf16.gmra.mrb[0].mxu0 %v333
      %v390 = vpop.f32.mrb[0].mxu0
      %v391 = vadd.f32 0.0, %v390
      %v392 = vpop.f32.mrb[0].mxu0
      %v393 = vadd.f32 0.0, %v392
      %v394 = vpop.f32.mrb[0].mxu0
      %v395 = vadd.f32 0.0, %v394
      %v396 = vpop.f32.mrb[0].mxu0
      %v397 = vadd.f32 0.0, %v396
      %398 = vmatprep.mubr.bf16.mxu0 0
      %399 = vmatmul.mubr.bf16.gmra.mrb[0].mxu0 %v336
      %v400 = vpop.f32.mrb[0].mxu0
      %v401 = vadd.f32 0.0, %v400
      %v402 = vpop.f32.mrb[0].mxu0
      %v403 = vadd.f32 0.0, %v402
      %v404 = vpop.f32.mrb[0].mxu0
      %v405 = vadd.f32 0.0, %v404
      %v406 = vpop.f32.mrb[0].mxu0
      %v407 = vadd.f32 0.0, %v406
      %408 = vmatprep.mubr.bf16.mxu0 0
      %409 = vmatmul.mubr.bf16.gmra.mrb[0].mxu0 %v339
      %v410 = vpop.f32.mrb[0].mxu0
      %v411 = vadd.f32 0.0, %v410
      %v412 = vpop.f32.mrb[0].mxu0
      %v413 = vadd.f32 0.0, %v412
      %v414 = vpop.f32.mrb[0].mxu0
      %v415 = vadd.f32 0.0, %v414
      %v416 = vpop.f32.mrb[0].mxu0
      %v417 = vadd.f32 0.0, %v416
      %418 = vmatprep.mubr.bf16.mxu0 0
      %419 = vmatmul.mubr.bf16.gmra.mrb[0].mxu0 %v342
      %v420 = vpop.f32.mrb[0].mxu0
      %v421 = vadd.f32 0.0, %v420
      %v422 = vpop.f32.mrb[0].mxu0
      %v423 = vadd.f32 0.0, %v422
      %v424 = vpop.f32.mrb[0].mxu0
      %v425 = vadd.f32 0.0, %v424
      %v426 = vpop.f32.mrb[0].mxu0
      %v427 = vadd.f32 0.0, %v426
      %428 = vmatprep.mubr.bf16.mxu0 0
      %429 = vmatmul.mubr.bf16.gmra.mrb[0].mxu0 %v345
      %v430 = vpop.f32.mrb[0].mxu0
      %v431 = vadd.f32 0.0, %v430
      %v432 = vpop.f32.mrb[0].mxu0
      %v433 = vadd.f32 0.0, %v432
      %v434 = vpop.f32.mrb[0].mxu0
      %v435 = vadd.f32 0.0, %v434
      %v436 = vpop.f32.mrb[0].mxu0
      %v437 = vadd.f32 0.0, %v436
      %438 = vmatprep.mubr.bf16.mxu0 0
      %439 = vmatmul.mubr.bf16.gmra.mrb[0].mxu0 %v348
      %v440 = vpop.f32.mrb[0].mxu0
      %v441 = vadd.f32 0.0, %v440
      %v442 = vpop.f32.mrb[0].mxu0
      %v443 = vadd.f32 0.0, %v442
      %v444 = vpop.f32.mrb[0].mxu0
      %v445 = vadd.f32 0.0, %v444
      %v446 = vpop.f32.mrb[0].mxu0
      %v447 = vadd.f32 0.0, %v446
      %448 = vmatprep.mubr.bf16.mxu0 0
      %449 = vmatmul.mubr.bf16.gmra.mrb[0].mxu0 %v351
      %v450 = vpop.f32.mrb[0].mxu0
      %v451 = vadd.f32 0.0, %v450
      %v452 = vpop.f32.mrb[0].mxu0
      %v453 = vadd.f32 0.0, %v452
      %v454 = vpop.f32.mrb[0].mxu0
      %v455 = vadd.f32 0.0, %v454
      %v456 = vpop.f32.mrb[0].mxu0
      %v457 = vadd.f32 0.0, %v456
      %458 = vmatprep.mubr.bf16.mxu0 0
      %459 = vmatmul.mubr.bf16.gmra.mrb[0].mxu0 %v354
      %v460 = vpop.f32.mrb[0].mxu0
      %v461 = vadd.f32 0.0, %v460
      %v462 = vpop.f32.mrb[0].mxu0
      %v463 = vadd.f32 0.0, %v462
      %v464 = vpop.f32.mrb[0].mxu0
      %v465 = vadd.f32 0.0, %v464
      %v466 = vpop.f32.mrb[0].mxu0
      %v467 = vadd.f32 0.0, %v466
      %468 = vdwg.mxu0
      %v471 = vunpack.c.l.b16 %v258
      %v472 = vunpack.c.l.b16 %v259
      %v473 = vpack.c.b16 %v472, %v471
      %v476 = vunpack.c.l.b16 %v276
      %v477 = vunpack.c.h.b16 %v276
      %v478 = vunpack.c.l.b16 %v277
      %v479 = vunpack.c.h.b16 %v277
      %v480 = vpack.c.b16 %v478, %v476
      %v481 = vpack.c.b16 %v479, %v477
      %v485 = vsel %vm331, %v473, 0
      %487 = vmatprep.subr.bf16.mxu0 %v481
      %488 = vmatpush1.bf16.msra.mxu0 %v480
      %489 = vmatprep.subr.bf16.mxu0 0
      %490 = vmatpush1.bf16.msra.mxu0 0
      %491 = vmatprep.subr.bf16.mxu0 0
      %492 = vmatpush1.bf16.msra.mxu0 0
      %493 = vmatprep.subr.bf16.mxu0 0
      %494 = vmatpush1.bf16.msra.mxu0 0
      %495 = vmatprep.subr.bf16.mxu0 0
      %496 = vmatpush1.bf16.msra.mxu0 0
      %497 = vmatprep.subr.bf16.mxu0 0
      %498 = vmatpush1.bf16.msra.mxu0 0
      %499 = vmatprep.subr.bf16.mxu0 0
      %500 = vmatpush1.bf16.msra.mxu0 0
      %501 = vmatprep.subr.bf16.mxu0 0
      %502 = vmatpush1.bf16.msra.mxu0 0
      %503 = vmatprep.subr.bf16.mxu0 0
      %504 = vmatpush1.bf16.msra.mxu0 0
      %505 = vmatprep.subr.bf16.mxu0 0
      %506 = vmatpush1.bf16.msra.mxu0 0
      %507 = vmatprep.subr.bf16.mxu0 0
      %508 = vmatpush1.bf16.msra.mxu0 0
      %509 = vmatprep.subr.bf16.mxu0 0
      %510 = vmatpush1.bf16.msra.mxu0 0
      %511 = vmatprep.subr.bf16.mxu0 0
      %512 = vmatpush1.bf16.msra.mxu0 0
      %513 = vmatprep.subr.bf16.mxu0 0
      %514 = vmatpush1.bf16.msra.mxu0 0
      %515 = vmatprep.subr.bf16.mxu0 0
      %516 = vmatpush1.bf16.msra.mxu0 0
      %517 = vmatprep.subr.bf16.mxu0 0
      %518 = vmatpush1.bf16.msra.mxu0 0
      %519 = vmatprep.mubr.bf16.mxu0 0
      %520 = vmatmul.mubr.bf16.gmra.mrb[0].mxu0 %v485
      %v521 = vpop.f32.mrb[0].mxu0
      %v522 = vadd.f32 %v391, %v521
      %v523 = vpop.f32.mrb[0].mxu0
      %v524 = vadd.f32 %v393, %v523
      %v525 = vpop.f32.mrb[0].mxu0
      %v526 = vadd.f32 %v395, %v525
      %v527 = vpop.f32.mrb[0].mxu0
      %v528 = vadd.f32 %v397, %v527
      %529 = vmatprep.mubr.bf16.mxu0 0
      %530 = vmatmul.mubr.bf16.gmra.mrb[0].mxu0 %v333
      %v531 = vpop.f32.mrb[0].mxu0
      %v532 = vadd.f32 %v401, %v531
      %v533 = vpop.f32.mrb[0].mxu0
      %v534 = vadd.f32 %v403, %v533
      %v535 = vpop.f32.mrb[0].mxu0
      %v536 = vadd.f32 %v405, %v535
      %v537 = vpop.f32.mrb[0].mxu0
      %v538 = vadd.f32 %v407, %v537
      %539 = vmatprep.mubr.bf16.mxu0 0
      %540 = vmatmul.mubr.bf16.gmra.mrb[0].mxu0 %v336
      %v541 = vpop.f32.mrb[0].mxu0
      %v542 = vadd.f32 %v411, %v541
      %v543 = vpop.f32.mrb[0].mxu0
      %v544 = vadd.f32 %v413, %v543
      %v545 = vpop.f32.mrb[0].mxu0
      %v546 = vadd.f32 %v415, %v545
      %v547 = vpop.f32.mrb[0].mxu0
      %v548 = vadd.f32 %v417, %v547
      %549 = vmatprep.mubr.bf16.mxu0 0
      %550 = vmatmul.mubr.bf16.gmra.mrb[0].mxu0 %v339
      %v551 = vpop.f32.mrb[0].mxu0
      %v552 = vadd.f32 %v421, %v551
      %v553 = vpop.f32.mrb[0].mxu0
      %v554 = vadd.f32 %v423, %v553
      %v555 = vpop.f32.mrb[0].mxu0
      %v556 = vadd.f32 %v425, %v555
      %v557 = vpop.f32.mrb[0].mxu0
      %v558 = vadd.f32 %v427, %v557
      %559 = vmatprep.mubr.bf16.mxu0 0
      %560 = vmatmul.mubr.bf16.gmra.mrb[0].mxu0 %v342
      %v561 = vpop.f32.mrb[0].mxu0
      %v562 = vadd.f32 %v431, %v561
      %v563 = vpop.f32.mrb[0].mxu0
      %v564 = vadd.f32 %v433, %v563
      %v565 = vpop.f32.mrb[0].mxu0
      %v566 = vadd.f32 %v435, %v565
      %v567 = vpop.f32.mrb[0].mxu0
      %v568 = vadd.f32 %v437, %v567
      %569 = vmatprep.mubr.bf16.mxu0 0
      %570 = vmatmul.mubr.bf16.gmra.mrb[0].mxu0 %v345
      %v571 = vpop.f32.mrb[0].mxu0
      %v572 = vadd.f32 %v441, %v571
      %v573 = vpop.f32.mrb[0].mxu0
      %v574 = vadd.f32 %v443, %v573
      %v575 = vpop.f32.mrb[0].mxu0
      %v576 = vadd.f32 %v445, %v575
      %v577 = vpop.f32.mrb[0].mxu0
      %v578 = vadd.f32 %v447, %v577
      %579 = vmatprep.mubr.bf16.mxu0 0
      %580 = vmatmul.mubr.bf16.gmra.mrb[0].mxu0 %v348
      %v581 = vpop.f32.mrb[0].mxu0
      %v582 = vadd.f32 %v451, %v581
      %v583 = vpop.f32.mrb[0].mxu0
      %v584 = vadd.f32 %v453, %v583
      %v585 = vpop.f32.mrb[0].mxu0
      %v586 = vadd.f32 %v455, %v585
      %v587 = vpop.f32.mrb[0].mxu0
      %v588 = vadd.f32 %v457, %v587
      %589 = vmatprep.mubr.bf16.mxu0 0
      %590 = vmatmul.mubr.bf16.gmra.mrb[0].mxu0 %v351
      %v591 = vpop.f32.mrb[0].mxu0
      %v592 = vadd.f32 %v461, %v591
      %v593 = vpop.f32.mrb[0].mxu0
      %v594 = vadd.f32 %v463, %v593
      %v595 = vpop.f32.mrb[0].mxu0
      %v596 = vadd.f32 %v465, %v595
      %v597 = vpop.f32.mrb[0].mxu0
      %v598 = vadd.f32 %v467, %v597
      %599 = vdwg.mxu0
      %vm616 = vcmask 1046528
      %v617 = vrot.slane %v524, 1
      %v618 = vrot.slane %v528, 1
      %v619 = vsel %vm616, %v617, %v618
      %v620 = vrot.slane %v534, 1
      %v621 = vsel %vm616, %v618, %v620
      %v622 = vrot.slane %v538, 1
      %v623 = vsel %vm616, %v620, %v622
      %v624 = vrot.slane %v544, 1
      %v625 = vsel %vm616, %v622, %v624
      %v626 = vrot.slane %v548, 1
      %v627 = vsel %vm616, %v624, %v626
      %v628 = vrot.slane %v554, 1
      %v629 = vsel %vm616, %v626, %v628
      %v630 = vrot.slane %v558, 1
      %v631 = vsel %vm616, %v628, %v630
      %v632 = vrot.slane %v564, 1
      %v633 = vsel %vm616, %v630, %v632
      %v634 = vrot.slane %v568, 1
      %v635 = vsel %vm616, %v632, %v634
      %v636 = vrot.slane %v574, 1
      %v637 = vsel %vm616, %v634, %v636
      %v638 = vrot.slane %v578, 1
      %v639 = vsel %vm616, %v636, %v638
      %v640 = vrot.slane %v584, 1
      %v641 = vsel %vm616, %v638, %v640
      %v642 = vrot.slane %v588, 1
      %v643 = vsel %vm616, %v640, %v642
      %v644 = vrot.slane %v594, 1
      %v645 = vsel %vm616, %v642, %v644
      %v646 = vrot.slane %v598, 1
      %v647 = vsel %vm616, %v644, %v646
      %v664 = vsel %vm616, %v646, 0.0
      %v665 = vadd.f32 %v522, %v619
      %v666 = vadd.f32 %v526, %v621
      %v667 = vadd.f32 %v532, %v623
      %v668 = vadd.f32 %v536, %v625
      %v669 = vadd.f32 %v542, %v627
      %v670 = vadd.f32 %v546, %v629
      %v671 = vadd.f32 %v552, %v631
      %v672 = vadd.f32 %v556, %v633
      %v673 = vadd.f32 %v562, %v635
      %v674 = vadd.f32 %v566, %v637
      %v675 = vadd.f32 %v572, %v639
      %v676 = vadd.f32 %v576, %v641
      %v677 = vadd.f32 %v582, %v643
      %v678 = vadd.f32 %v586, %v645
      %v679 = vadd.f32 %v592, %v647
      %v680 = vadd.f32 %v596, %v664
      %v681 = vld [vmem:[%s2] sm:$0x1]
      %v683 = vlaneseq
      %v684 = vshrl.u32 %v683, 7
      %v685 = vsub.s32 0, %v684
      %v686 = vrot.slane %v681, %v685
      %v688 = vadd.f32 %v665, %v686
      %v689 = vadd.f32 %v666, %v686
      %v690 = vadd.f32 %v667, %v686
      %v691 = vadd.f32 %v668, %v686
      %v692 = vadd.f32 %v669, %v686
      %v693 = vadd.f32 %v670, %v686
      %v694 = vadd.f32 %v671, %v686
      %v695 = vadd.f32 %v672, %v686
      %v696 = vadd.f32 %v673, %v686
      %v697 = vadd.f32 %v674, %v686
      %v698 = vadd.f32 %v675, %v686
      %v699 = vadd.f32 %v676, %v686
      %v700 = vadd.f32 %v677, %v686
      %v701 = vadd.f32 %v678, %v686
      %v702 = vadd.f32 %v679, %v686
      %v703 = vadd.f32 %v680, %v686
      %v704 = vmax.f32 %v688, 0.0
      %v705 = vmax.f32 %v689, 0.0
      %v706 = vmax.f32 %v690, 0.0
      %v707 = vmax.f32 %v691, 0.0
      %v708 = vmax.f32 %v692, 0.0
      %v709 = vmax.f32 %v693, 0.0
      %v710 = vmax.f32 %v694, 0.0
      %v711 = vmax.f32 %v695, 0.0
      %v712 = vmax.f32 %v696, 0.0
      %v713 = vmax.f32 %v697, 0.0
      %v714 = vmax.f32 %v698, 0.0
      %v715 = vmax.f32 %v699, 0.0
      %v716 = vmax.f32 %v700, 0.0
      %v717 = vmax.f32 %v701, 0.0
      %v718 = vmax.f32 %v702, 0.0
      %v719 = vmax.f32 %v703, 0.0
      %v720 = vld [vmem:[%s245] sm:$0xff]
      %v721 = vld [vmem:[%s245 + $0x8] sm:$0xff]
      %v722 = vld [vmem:[%s245 + $0x10] sm:$0xff]
      %v723 = vld [vmem:[%s245 + $0x18] sm:$0xff]
      %v724 = vld [vmem:[%s245 + $0x20] sm:$0xff]
      %v725 = vld [vmem:[%s245 + $0x28] sm:$0xff]
      %v726 = vld [vmem:[%s245 + $0x30] sm:$0xff]
      %v727 = vld [vmem:[%s245 + $0x38] sm:$0xff]
      %v728 = vld [vmem:[%s245 + $0x40] sm:$0xff]
      %v729 = vld [vmem:[%s245 + $0x48] sm:$0xff]
      %v730 = vld [vmem:[%s245 + $0x50] sm:$0xff]
      %v731 = vld [vmem:[%s245 + $0x58] sm:$0xff]
      %v732 = vld [vmem:[%s245 + $0x60] sm:$0xff]
      %v733 = vld [vmem:[%s245 + $0x68] sm:$0xff]
      %v734 = vld [vmem:[%s245 + $0x70] sm:$0xff]
      %v735 = vld [vmem:[%s245 + $0x78] sm:$0xff]
      %737 = vset.pattern.permute.xlu0 0
      %738 = vperm.xlu0 %737, %v720
      %v739 = vpop.permute.xlu0 %738
      %742 = vset.pattern.permute.xlu0 0
      %743 = vperm.xlu0 %742, %v721
      %v744 = vpop.permute.xlu0 %743
      %747 = vset.pattern.permute.xlu0 0
      %748 = vperm.xlu0 %747, %v722
      %v749 = vpop.permute.xlu0 %748
      %752 = vset.pattern.permute.xlu0 0
      %753 = vperm.xlu0 %752, %v723
      %v754 = vpop.permute.xlu0 %753
      %757 = vset.pattern.permute.xlu0 0
      %758 = vperm.xlu0 %757, %v724
      %v759 = vpop.permute.xlu0 %758
      %762 = vset.pattern.permute.xlu0 0
      %763 = vperm.xlu0 %762, %v725
      %v764 = vpop.permute.xlu0 %763
      %767 = vset.pattern.permute.xlu0 0
      %768 = vperm.xlu0 %767, %v726
      %v769 = vpop.permute.xlu0 %768
      %772 = vset.pattern.permute.xlu0 0
      %773 = vperm.xlu0 %772, %v727
      %v774 = vpop.permute.xlu0 %773
      %777 = vset.pattern.permute.xlu0 0
      %778 = vperm.xlu0 %777, %v728
      %v779 = vpop.permute.xlu0 %778
      %782 = vset.pattern.permute.xlu0 0
      %783 = vperm.xlu0 %782, %v729
      %v784 = vpop.permute.xlu0 %783
      %787 = vset.pattern.permute.xlu0 0
      %788 = vperm.xlu0 %787, %v730
      %v789 = vpop.permute.xlu0 %788
      %792 = vset.pattern.permute.xlu0 0
      %793 = vperm.xlu0 %792, %v731
      %v794 = vpop.permute.xlu0 %793
      %797 = vset.pattern.permute.xlu0 0
      %798 = vperm.xlu0 %797, %v732
      %v799 = vpop.permute.xlu0 %798
      %802 = vset.pattern.permute.xlu0 0
      %803 = vperm.xlu0 %802, %v733
      %v804 = vpop.permute.xlu0 %803
      %807 = vset.pattern.permute.xlu0 0
      %808 = vperm.xlu0 %807, %v734
      %v809 = vpop.permute.xlu0 %808
      %812 = vset.pattern.permute.xlu0 0
      %813 = vperm.xlu0 %812, %v735
      %v814 = vpop.permute.xlu0 %813
      %v816 = vmul.f32 %v704, %v739
      %v817 = vmul.f32 %v705, %v744
      %v818 = vmul.f32 %v706, %v749
      %v819 = vmul.f32 %v707, %v754
      %v820 = vmul.f32 %v708, %v759
      %v821 = vmul.f32 %v709, %v764
      %v822 = vmul.f32 %v710, %v769
      %v823 = vmul.f32 %v711, %v774
      %v824 = vmul.f32 %v712, %v779
      %v825 = vmul.f32 %v713, %v784
      %v826 = vmul.f32 %v714, %v789
      %v827 = vmul.f32 %v715, %v794
      %v828 = vmul.f32 %v716, %v799
      %v829 = vmul.f32 %v717, %v804
      %v830 = vmul.f32 %v718, %v809
      %v831 = vmul.f32 %v719, %v814
      %v832 = vpack.c.bf16 %v817, %v816
      %v833 = vpack.c.bf16 %v819, %v818
      %v834 = vpack.c.bf16 %v821, %v820
      %v835 = vpack.c.bf16 %v823, %v822
      %v836 = vpack.c.bf16 %v825, %v824
      %v837 = vpack.c.bf16 %v827, %v826
      %v838 = vpack.c.bf16 %v829, %v828
      %v839 = vpack.c.bf16 %v831, %v830
      %v848 = vunpack.c.l.b16 %v832
      %v849 = vunpack.c.h.b16 %v832
      %v850 = vunpack.c.l.b16 %v833
      %v851 = vunpack.c.h.b16 %v833
      %v852 = vunpack.c.l.b16 %v834
      %v853 = vunpack.c.h.b16 %v834
      %v854 = vunpack.c.l.b16 %v835
      %v855 = vunpack.c.h.b16 %v835
      %v856 = vunpack.c.l.b16 %v836
      %v857 = vunpack.c.h.b16 %v836
      %v858 = vunpack.c.l.b16 %v837
      %v859 = vunpack.c.h.b16 %v837
      %v860 = vunpack.c.l.b16 %v838
      %v861 = vunpack.c.h.b16 %v838
      %v862 = vunpack.c.l.b16 %v839
      %v863 = vunpack.c.h.b16 %v839
      %v864 = vpack.c.b16 %v848, %v848
      %v865 = vpack.c.b16 %v849, %v849
      %v866 = vpack.c.b16 %v850, %v850
      %v867 = vpack.c.b16 %v851, %v851
      %v868 = vpack.c.b16 %v852, %v852
      %v869 = vpack.c.b16 %v853, %v853
      %v870 = vpack.c.b16 %v854, %v854
      %v871 = vpack.c.b16 %v855, %v855
      %v872 = vpack.c.b16 %v856, %v856
      %v873 = vpack.c.b16 %v857, %v857
      %v874 = vpack.c.b16 %v858, %v858
      %v875 = vpack.c.b16 %v859, %v859
      %v876 = vpack.c.b16 %v860, %v860
      %v877 = vpack.c.b16 %v861, %v861
      %v878 = vpack.c.b16 %v862, %v862
      %v879 = vpack.c.b16 %v863, %v863
      %896 = vst [vmem:[%s255] sm:$0xf] %v864
      %897 = vst [vmem:[%s255 + $0x4] sm:$0xf] %v865
      %898 = vst [vmem:[%s255 + $0x8] sm:$0xf] %v866
      %899 = vst [vmem:[%s255 + $0xc] sm:$0xf] %v867
      %900 = vst [vmem:[%s255 + $0x10] sm:$0xf] %v868
      %901 = vst [vmem:[%s255 + $0x14] sm:$0xf] %v869
      %902 = vst [vmem:[%s255 + $0x18] sm:$0xf] %v870
      %903 = vst [vmem:[%s255 + $0x1c] sm:$0xf] %v871
      %904 = vst [vmem:[%s255 + $0x20] sm:$0xf] %v872
      %905 = vst [vmem:[%s255 + $0x24] sm:$0xf] %v873
      %906 = vst [vmem:[%s255 + $0x28] sm:$0xf] %v874
      %907 = vst [vmem:[%s255 + $0x2c] sm:$0xf] %v875
      %908 = vst [vmem:[%s255 + $0x30] sm:$0xf] %v876
      %909 = vst [vmem:[%s255 + $0x34] sm:$0xf] %v877
      %910 = vst [vmem:[%s255 + $0x38] sm:$0xf] %v878
      %911 = vst [vmem:[%s255 + $0x3c] sm:$0xf] %v879
      %s912 = smul.u32 16, %s20
      %p913 = scmp.lt.s32.totalorder %s19, 1
      %s914 = scalar_select %p913, %s19, 1
      %p915 = scmp.lt.s32.totalorder %s912, 15
      %s916 = scalar_select %p915, %s912, 15
      %s917 = smul.addr %s914, 16
      %s918 = sadd.s32 %s916, %s917
      %s919 = smul.addr %s918, 4
      %s920 = scalar_lea.vmem %s4, %s919
      // Predicated region
      $region37: #{_forward.2} parent=35 // pred_check
        %p921 = pneg %p143
      $region38: #{_forward.2} parent=35 // pred_check_branch
        %923 = sbr.rel (%p921) target = $region40
      $region39: #{_forward.2} parent=35 // pred_region
        %s924 = smul.u32 16, %s20
      $region40: #{_forward.2} parent=35 // pred_fallthru
        _
    $region36: #{_forward.2} parent=5 // pred_fallthru
      _
    %p925 = scmp.le.s32.totalorder 2, %s10
    // Predicated region
    $region41: #{_forward.2} parent=5 // pred_check
      %p926 = pneg %p925
    $region42: #{_forward.2} parent=5 // pred_check_branch
      %928 = sbr.rel (%p926) target = $region44
    $region43: #{_forward.2} parent=5 // pred_region
      %s929 = ssub.s32 %s10, 2
      // Predicated region
      $region45: #{_forward.2} parent=43 // pred_check
        %p930 = pneg %p149
      $region46: #{_forward.2} parent=43 // pred_check_branch
        %932 = sbr.rel (%p930) target = $region48
      $region47: #{_forward.2} parent=43 // pred_region
        %s933 = smul.u32 16, %s22
        %p934 = scmp.lt.s32.totalorder %s21, 1
        %s935 = scalar_select %p934, %s21, 1
        %p936 = scmp.lt.s32.totalorder %s933, 15
        %s937 = scalar_select %p936, %s933, 15
        %s938 = smul.addr %s935, 16
        %s939 = sadd.s32 %s937, %s938
        %s940 = smul.addr %s939, 4
        %s941 = scalar_lea.vmem %s4, %s940
      $region48: #{_forward.2} parent=43 // pred_fallthru
        _
    $region44: #{_forward.2} parent=5 // pred_fallthru
      _
  $region6: #{_forward.2} parent=0 // loop_footer
    %s14 = sadd.s32 1, %s10
  $region7: #{_forward.2} parent=0 // loop_footer_branch
    %9 = sbr.rel target = $region3
  $region8: #{_forward.2} parent=0 // loop_exit
    _

// kernel: _forward.3
$region0: #{_forward.3}
  #allocation0 [shape = 'u32[]', space=smem, size = 0x4, offset = 0x4, fixed_abs, tag = 'smem constant byte address 0x4 - core index']
  #allocation1 [shape = 'u32[144,128]{1,0:T(1,128)}', space=vmem, size = 0x12000, scoped, tag = 'internal scratch']
  %s0 = inlined_call_operand.vmem [shape: bf16[2,1,80,32], index: 0, kind: input, shape index: {}]
  %s1 = inlined_call_operand.vmem [shape: bf16[2,32,256], index: 1, kind: input, shape index: {}]
  %s2 = inlined_call_operand.vmem [shape: f32[1,128], index: 2, kind: input, shape index: {}]
  %s3 = inlined_call_operand.vmem [shape: f32[64,1], index: 3, kind: input, shape index: {}]
  %s4 = inlined_call_operand.vmem [shape: bf16[2,64,128], index: 4, kind: output, shape index: {}]
  %s5 = sld [smem:[#allocation0]]
  $region49: #{_forward.3} parent=0
    _
  %s7 = ssub.s32 1, %s5
  %s8 = scalar_select 0, %s7, %s5
  loop: start=0, step=1, limit=4
  $region2: #{_forward.3} parent=0 // loop_pre_header
    _
  $region3: #{_forward.3} parent=0 // loop_header
    %s10 = sphi 0, %s14
    %p11 = scmp.ge.s32.totalorder %s10, 4
    %s17 = sphi 0, %s29
    %s18 = sphi 0, %s25
    %s19 = sphi 0, %s17
    %s20 = sphi 0, %s18
    %s21 = sphi 0, %s19
    %s22 = sphi 0, %s20
    %s34 = sphi 0, %s36
    %s37 = sphi 0, %s34
    %s38 = sphi 0, %s37
    %s54 = sphi 0, %s38
    %s58 = sphi 0, %s58
    %s60 = sphi 0, %s58
    %s61 = sphi 0, %s60
    %s75 = sphi 0, %s61
    %s79 = sphi 0, %s79
    %s81 = sphi 0, %s79
    %s82 = sphi 0, %s81
    %s96 = sphi 0, %s82
    %s102 = sphi 0, %s104
    %s105 = sphi 0, %s102
    %s106 = sphi 0, %s105
    %s122 = sphi 0, %s106
    %s130 = sphi 0, %s132
    %s133 = sphi 0, %s130
    %s134 = sphi 0, %s133
    %s150 = sphi 0, %s134
  $region4: #{_forward.3} parent=0 // loop_header_branch
    %13 = sbr.rel (%p11) target = $region8
  $region5: #{_forward.3} parent=0 // loop_body
    %s15 = ssub.s32 %s10, 1
    %s16 = ssub.s32 %s10, 2
    %s23 = sadd.s32 1, %s18
    %p24 = scmp.ge.s32.totalorder %s23, 1
    %s25 = scalar_select %p24, 0, %s23
    %s26 = sadd.s32 1, %s17
    %s27 = scalar_select %p24, %s26, %s17
    %p28 = scmp.ge.s32.totalorder %s27, 2
    %s29 = scalar_select %p28, 0, %s27
    %s30 = ssub.s32 %s17, %s29
    %s31 = ssub.s32 %s18, %s25
    %s32 = sor.u32 %s30, %s31
    %p33 = scmp.eq.s32.totalorder %s32, 0
    %s35 = sadd.s32 %s34, 1
    %s36 = scalar_select %p33, %s34, %s35
    %p39 = pneg %p33
    %p40 = scmp.eq.s32.totalorder %s10, 1
    %p41 = por %p39, %p40
    %p42 = scmp.ne.s32.totalorder %s34, %s37
    %p43 = scmp.eq.s32.totalorder %s10, 0
    %p44 = por %p42, %p43
    %p45 = scmp.ne.s32.totalorder %s34, %s37
    %p46 = scmp.eq.s32.totalorder %s15, 1
    %p47 = por %p45, %p46
    %p48 = scmp.ne.s32.totalorder %s37, %s38
    %p49 = scmp.eq.s32.totalorder %s15, 0
    %p50 = por %p48, %p49
    %p51 = scmp.ne.s32.totalorder %s37, %s38
    %p52 = scmp.eq.s32.totalorder %s16, 1
    %p53 = por %p51, %p52
    %p55 = scmp.ne.s32.totalorder %s38, %s54
    %p56 = scmp.eq.s32.totalorder %s16, 0
    %p57 = por %p55, %p56
    %s59 = sadd.s32 %s58, 1
    %p62 = scmp.eq.s32.totalorder %s10, 1
    %p63 = scmp.ne.s32.totalorder %s58, %s60
    %p64 = scmp.eq.s32.totalorder %s10, 0
    %p65 = por %p63, %p64
    %p66 = scmp.ne.s32.totalorder %s58, %s60
    %p67 = scmp.eq.s32.totalorder %s15, 1
    %p68 = por %p66, %p67
    %p69 = scmp.ne.s32.totalorder %s60, %s61
    %p70 = scmp.eq.s32.totalorder %s15, 0
    %p71 = por %p69, %p70
    %p72 = scmp.ne.s32.totalorder %s60, %s61
    %p73 = scmp.eq.s32.totalorder %s16, 1
    %p74 = por %p72, %p73
    %p76 = scmp.ne.s32.totalorder %s61, %s75
    %p77 = scmp.eq.s32.totalorder %s16, 0
    %p78 = por %p76, %p77
    %s80 = sadd.s32 %s79, 1
    %p83 = scmp.eq.s32.totalorder %s10, 1
    %p84 = scmp.ne.s32.totalorder %s79, %s81
    %p85 = scmp.eq.s32.totalorder %s10, 0
    %p86 = por %p84, %p85
    %p87 = scmp.ne.s32.totalorder %s79, %s81
    %p88 = scmp.eq.s32.totalorder %s15, 1
    %p89 = por %p87, %p88
    %p90 = scmp.ne.s32.totalorder %s81, %s82
    %p91 = scmp.eq.s32.totalorder %s15, 0
    %p92 = por %p90, %p91
    %p93 = scmp.ne.s32.totalorder %s81, %s82
    %p94 = scmp.eq.s32.totalorder %s16, 1
    %p95 = por %p93, %p94
    %p97 = scmp.ne.s32.totalorder %s82, %s96
    %p98 = scmp.eq.s32.totalorder %s16, 0
    %p99 = por %p97, %p98
    %s100 = ssub.s32 %s18, %s25
    %p101 = scmp.eq.s32.totalorder %s100, 0
    %s103 = sadd.s32 %s102, 1
    %s104 = scalar_select %p101, %s102, %s103
    %p107 = pneg %p101
    %p108 = scmp.eq.s32.totalorder %s10, 1
    %p109 = por %p107, %p108
    %p110 = scmp.ne.s32.totalorder %s102, %s105
    %p111 = scmp.eq.s32.totalorder %s10, 0
    %p112 = por %p110, %p111
    %p113 = scmp.ne.s32.totalorder %s102, %s105
    %p114 = scmp.eq.s32.totalorder %s15, 1
    %p115 = por %p113, %p114
    %p116 = scmp.ne.s32.totalorder %s105, %s106
    %p117 = scmp.eq.s32.totalorder %s15, 0
    %p118 = por %p116, %p117
    %p119 = scmp.ne.s32.totalorder %s105, %s106
    %p120 = scmp.eq.s32.totalorder %s16, 1
    %p121 = por %p119, %p120
    %p123 = scmp.ne.s32.totalorder %s106, %s122
    %p124 = scmp.eq.s32.totalorder %s16, 0
    %p125 = por %p123, %p124
    %s126 = ssub.s32 %s17, %s29
    %s127 = ssub.s32 %s18, %s25
    %s128 = sor.u32 %s126, %s127
    %p129 = scmp.eq.s32.totalorder %s128, 0
    %s131 = sadd.s32 %s130, 1
    %s132 = scalar_select %p129, %s130, %s131
    %p135 = pneg %p129
    %p136 = scmp.eq.s32.totalorder %s10, 1
    %p137 = por %p135, %p136
    %p138 = scmp.ne.s32.totalorder %s130, %s133
    %p139 = scmp.eq.s32.totalorder %s10, 0
    %p140 = por %p138, %p139
    %p141 = scmp.ne.s32.totalorder %s130, %s133
    %p142 = scmp.eq.s32.totalorder %s15, 1
    %p143 = por %p141, %p142
    %p144 = scmp.ne.s32.totalorder %s133, %s134
    %p145 = scmp.eq.s32.totalorder %s15, 0
    %p146 = por %p144, %p145
    %p147 = scmp.ne.s32.totalorder %s133, %s134
    %p148 = scmp.eq.s32.totalorder %s16, 1
    %p149 = por %p147, %p148
    %p151 = scmp.ne.s32.totalorder %s134, %s150
    %p152 = scmp.eq.s32.totalorder %s16, 0
    %p153 = por %p151, %p152
    %p154 = scmp.le.s32.totalorder 1, %s10
    %p155 = scmp.lt.s32.totalorder %s10, 3
    %p156 = pnand %p154, %p155
    %p157 = pneg %p156
    // Predicated region
    $region9: #{_forward.3} parent=5 // pred_check
      _
    $region10: #{_forward.3} parent=5 // pred_check_branch
      %159 = sbr.rel (%p156) target = $region12
    $region11: #{_forward.3} parent=5 // pred_region
      %s160 = ssub.s32 %s10, 1
      // Predicated region
      $region13: #{_forward.3} parent=11 // pred_check
        %p161 = pneg %p71
      $region14: #{_forward.3} parent=11 // pred_check_branch
        %163 = sbr.rel (%p161) target = $region16
      $region15: #{_forward.3} parent=11 // pred_region
        _
      $region16: #{_forward.3} parent=11 // pred_fallthru
        _
      // Predicated region
      $region17: #{_forward.3} parent=11 // pred_check
        %p164 = pneg %p92
      $region18: #{_forward.3} parent=11 // pred_check_branch
        %166 = sbr.rel (%p164) target = $region20
      $region19: #{_forward.3} parent=11 // pred_region
        _
      $region20: #{_forward.3} parent=11 // pred_fallthru
        _
      // Predicated region
      $region21: #{_forward.3} parent=11 // pred_check
        %p167 = pneg %p118
      $region22: #{_forward.3} parent=11 // pred_check_branch
        %169 = sbr.rel (%p167) target = $region24
      $region23: #{_forward.3} parent=11 // pred_region
        %s170 = smul.u32 8, %s20
        %p171 = scmp.lt.s32.totalorder %s170, 7
        %s172 = scalar_select %p171, %s170, 7
        %s173 = smul.addr %s172, 8
        %s174 = scalar_lea.vmem %s3, %s173
        %s175 = smul.u32 8, %s20
      $region24: #{_forward.3} parent=11 // pred_fallthru
        _
    $region12: #{_forward.3} parent=5 // pred_fallthru
      _
    %p176 = scmp.lt.s32.totalorder %s10, 2
    // Predicated region
    $region25: #{_forward.3} parent=5 // pred_check
      %p177 = pneg %p176
    $region26: #{_forward.3} parent=5 // pred_check_branch
      %179 = sbr.rel (%p177) target = $region28
    $region27: #{_forward.3} parent=5 // pred_region
      // Predicated region
      $region29: #{_forward.3} parent=27 // pred_check
        %p180 = pneg %p44
      $region30: #{_forward.3} parent=27 // pred_check_branch
        %182 = sbr.rel (%p180) target = $region32
      $region31: #{_forward.3} parent=27 // pred_region
        %p183 = scmp.lt.s32.totalorder %s17, 1
        %s184 = scalar_select %p183, %s17, 1
        %p185 = scmp.lt.s32.totalorder %s18, 0
        %s186 = scalar_select %p185, %s18, 0
        %s187 = smul.addr %s186, 10
        %s188 = smul.addr %s184, 10
        %s189 = sadd.s32 %s187, %s188
        %s190 = smul.addr %s189, 4
        %s191 = scalar_lea.vmem %s0, %s190
      $region32: #{_forward.3} parent=27 // pred_fallthru
        _
    $region28: #{_forward.3} parent=5 // pred_fallthru
      _
    %p192 = scmp.le.s32.totalorder 1, %s10
    %p193 = scmp.lt.s32.totalorder %s10, 3
    %p194 = pnand %p192, %p193
    %p195 = pneg %p194
    // Predicated region
    $region33: #{_forward.3} parent=5 // pred_check
      _
    $region34: #{_forward.3} parent=5 // pred_check_branch
      %197 = sbr.rel (%p194) target = $region36
    $region35: #{_forward.3} parent=5 // pred_region
      %s198 = ssub.s32 %s10, 1
      %p199 = scmp.lt.s32.totalorder %s19, 1
      %s200 = scalar_select %p199, %s19, 1
      %p201 = scmp.lt.s32.totalorder %s20, 0
      %s202 = scalar_select %p201, %s20, 0
      %s203 = smul.addr %s202, 10
      %s204 = smul.addr %s200, 10
      %s205 = sadd.s32 %s203, %s204
      %s206 = smul.addr %s205, 4
      %s207 = scalar_lea.vmem %s0, %s206
      %p208 = pneg %p50
      %p209 = pneg %p47
      %p210 = pneg %p71
      %p211 = pneg %p68
      %p212 = pneg %p92
      %p213 = pneg %p89
      %s214 = smul.u32 8, %s20
      %p215 = scmp.lt.s32.totalorder %s214, 7
      %s216 = scalar_select %p215, %s214, 7
      %s217 = smul.addr %s216, 8
      %s218 = scalar_lea.vmem %s3, %s217
      %p219 = pneg %p118
      %p220 = pneg %p115
      %p221 = pneg %p146
      %p222 = pneg %p143
      %s223 = smul.u32 8, %s20
      %p224 = scmp.lt.s32.totalorder %s19, 1
      %s225 = scalar_select %p224, %s19, 1
      %p226 = scmp.lt.s32.totalorder %s223, 7
      %s227 = scalar_select %p226, %s223, 7
      %s228 = smul.addr %s225, 8
      %s229 = sadd.s32 %s227, %s228
      %s230 = smul.addr %s229, 4
      %s231 = scalar_lea.vmem %s4, %s230
      %p232 = scmp.lt.s32.totalorder %s19, 1
      %s233 = scalar_select %p232, %s19, 1
      %p234 = scmp.lt.s32.totalorder %s20, 0
      %s235 = scalar_select %p234, %s20, 0
      %s236 = smul.addr %s235, 10
      %s237 = smul.addr %s233, 10
      %s238 = sadd.s32 %s236, %s237
      %s239 = smul.addr %s238, 4
      %s240 = scalar_lea.vmem %s0, %s239
      %s241 = smul.u32 8, %s20
      %p242 = scmp.lt.s32.totalorder %s241, 7
      %s243 = scalar_select %p242, %s241, 7
      %s244 = smul.addr %s243, 8
      %s245 = scalar_lea.vmem %s3, %s244
      %s246 = smul.u32 8, %s20
      %s247 = smul.u32 8, %s20
      %p248 = scmp.lt.s32.totalorder %s19, 1
      %s249 = scalar_select %p248, %s19, 1
      %p250 = scmp.lt.s32.totalorder %s247, 7
      %s251 = scalar_select %p250, %s247, 7
      %s252 = smul.addr %s249, 8
      %s253 = sadd.s32 %s251, %s252
      %s254 = smul.addr %s253, 4
      %s255 = scalar_lea.vmem %s4, %s254
      %s256 = smul.u32 8, %s20
      %v258 = vld [vmem:[%s240] sm:$0xf]
      %v259 = vld [vmem:[%s240 + $0x4] sm:$0xf]
      %v260 = vld [vmem:[%s240 + $0x8] sm:$0xf]
      %v261 = vld [vmem:[%s240 + $0xc] sm:$0xf]
      %v262 = vld [vmem:[%s240 + $0x10] sm:$0xf]
      %v263 = vld [vmem:[%s240 + $0x14] sm:$0xf]
      %v264 = vld [vmem:[%s240 + $0x18] sm:$0xf]
      %v265 = vld [vmem:[%s240 + $0x1c] sm:$0xf]
      %v266 = vld [vmem:[%s240 + $0x20] sm:$0xf]
      %v267 = vld [vmem:[%s240 + $0x24] sm:$0xf]
      %v268 = vld [vmem:[%s1] sm:$0xff]
      %v269 = vld [vmem:[%s1 + $0x8] sm:$0xff]
      %v270 = vld [vmem:[%s1 + $0x10] sm:$0xff]
      %v271 = vld [vmem:[%s1 + $0x18] sm:$0xff]
      %s272 = scalar_lea.vmem %s1, 32
      %v273 = vld [vmem:[%s272] sm:$0xff]
      %v274 = vld [vmem:[%s272 + $0x8] sm:$0xff]
      %v275 = vld [vmem:[%s272 + $0x10] sm:$0xff]
      %v276 = vld [vmem:[%s272 + $0x18] sm:$0xff]
      %v285 = vunpack.c.l.b16 %v260
      %v286 = vunpack.c.l.b16 %v261
      %v287 = vunpack.c.l.b16 %v262
      %v288 = vunpack.c.l.b16 %v263
      %v289 = vunpack.c.l.b16 %v264
      %v290 = vunpack.c.l.b16 %v265
      %v291 = vunpack.c.l.b16 %v266
      %v292 = vunpack.c.l.b16 %v267
      %v293 = vpack.c.b16 %v286, %v285
      %v294 = vpack.c.b16 %v288, %v287
      %v295 = vpack.c.b16 %v290, %v289
      %v296 = vpack.c.b16 %v292, %v291
      %v301 = vunpack.c.l.b16 %v273
      %v302 = vunpack.c.h.b16 %v273
      %v303 = vunpack.c.l.b16 %v274
      %v304 = vunpack.c.h.b16 %v274
      %v305 = vunpack.c.l.b16 %v275
      %v306 = vunpack.c.h.b16 %v275
      %v307 = vunpack.c.l.b16 %v276
      %v308 = vunpack.c.h.b16 %v276
      %v309 = vpack.c.b16 %v303, %v301
      %v310 = vpack.c.b16 %v304, %v302
      %v311 = vpack.c.b16 %v307, %v305
      %v312 = vpack.c.b16 %v308, %v306
      %vm317 = vcmask 261120
      %v319 = vsel %vm317, %v293, 0
      %v322 = vsel %vm317, %v294, 0
      %v325 = vsel %vm317, %v295, 0
      %v328 = vsel %vm317, %v296, 0
      %330 = vmatprep.subr.bf16.mxu0 %v310
      %331 = vmatpush1.bf16.msra.mxu0 %v309
      %332 = vmatprep.subr.bf16.mxu0 %v312
      %333 = vmatpush1.bf16.msra.mxu0 %v311
      %334 = vmatprep.subr.bf16.mxu0 0
      %335 = vmatpush1.bf16.msra.mxu0 0
      %336 = vmatprep.subr.bf16.mxu0 0
      %337 = vmatpush1.bf16.msra.mxu0 0
      %338 = vmatprep.subr.bf16.mxu0 0
      %339 = vmatpush1.bf16.msra.mxu0 0
      %340 = vmatprep.subr.bf16.mxu0 0
      %341 = vmatpush1.bf16.msra.mxu0 0
      %342 = vmatprep.subr.bf16.mxu0 0
      %343 = vmatpush1.bf16.msra.mxu0 0
      %344 = vmatprep.subr.bf16.mxu0 0
      %345 = vmatpush1.bf16.msra.mxu0 0
      %346 = vmatprep.subr.bf16.mxu0 0
      %347 = vmatpush1.bf16.msra.mxu0 0
      %348 = vmatprep.subr.bf16.mxu0 0
      %349 = vmatpush1.bf16.msra.mxu0 0
      %350 = vmatprep.subr.bf16.mxu0 0
      %351 = vmatpush1.bf16.msra.mxu0 0
      %352 = vmatprep.subr.bf16.mxu0 0
      %353 = vmatpush1.bf16.msra.mxu0 0
      %354 = vmatprep.subr.bf16.mxu0 0
      %355 = vmatpush1.bf16.msra.mxu0 0
      %356 = vmatprep.subr.bf16.mxu0 0
      %357 = vmatpush1.bf16.msra.mxu0 0
      %358 = vmatprep.subr.bf16.mxu0 0
      %359 = vmatpush1.bf16.msra.mxu0 0
      %360 = vmatprep.subr.bf16.mxu0 0
      %361 = vmatpush1.bf16.msra.mxu0 0
      %362 = vmatprep.mubr.bf16.mxu0 0
      %363 = vmatmul.mubr.bf16.gmra.mrb[0].mxu0 %v319
      %v364 = vpop.f32.mrb[0].mxu0
      %v365 = vadd.f32 0.0, %v364
      %v366 = vpop.f32.mrb[0].mxu0
      %v367 = vadd.f32 0.0, %v366
      %v368 = vpop.f32.mrb[0].mxu0
      %v369 = vadd.f32 0.0, %v368
      %v370 = vpop.f32.mrb[0].mxu0
      %v371 = vadd.f32 0.0, %v370
      %372 = vmatprep.mubr.bf16.mxu0 0
      %373 = vmatmul.mubr.bf16.gmra.mrb[0].mxu0 %v322
      %v374 = vpop.f32.mrb[0].mxu0
      %v375 = vadd.f32 0.0, %v374
      %v376 = vpop.f32.mrb[0].mxu0
      %v377 = vadd.f32 0.0, %v376
      %v378 = vpop.f32.mrb[0].mxu0
      %v379 = vadd.f32 0.0, %v378
      %v380 = vpop.f32.mrb[0].mxu0
      %v381 = vadd.f32 0.0, %v380
      %382 = vmatprep.mubr.bf16.mxu0 0
      %383 = vmatmul.mubr.bf16.gmra.mrb[0].mxu0 %v325
      %v384 = vpop.f32.mrb[0].mxu0
      %v385 = vadd.f32 0.0, %v384
      %v386 = vpop.f32.mrb[0].mxu0
      %v387 = vadd.f32 0.0, %v386
      %v388 = vpop.f32.mrb[0].mxu0
      %v389 = vadd.f32 0.0, %v388
      %v390 = vpop.f32.mrb[0].mxu0
      %v391 = vadd.f32 0.0, %v390
      %392 = vmatprep.mubr.bf16.mxu0 0
      %393 = vmatmul.mubr.bf16.gmra.mrb[0].mxu0 %v328
      %v394 = vpop.f32.mrb[0].mxu0
      %v395 = vadd.f32 0.0, %v394
      %v396 = vpop.f32.mrb[0].mxu0
      %v397 = vadd.f32 0.0, %v396
      %v398 = vpop.f32.mrb[0].mxu0
      %v399 = vadd.f32 0.0, %v398
      %v400 = vpop.f32.mrb[0].mxu0
      %v401 = vadd.f32 0.0, %v400
      %402 = vdwg.mxu0
      %v405 = vunpack.c.l.b16 %v258
      %v406 = vunpack.c.l.b16 %v259
      %v407 = vpack.c.b16 %v406, %v405
      %v412 = vunpack.c.l.b16 %v268
      %v413 = vunpack.c.h.b16 %v268
      %v414 = vunpack.c.l.b16 %v269
      %v415 = vunpack.c.h.b16 %v269
      %v416 = vunpack.c.l.b16 %v270
      %v417 = vunpack.c.h.b16 %v270
      %v418 = vunpack.c.l.b16 %v271
      %v419 = vunpack.c.h.b16 %v271
      %v420 = vpack.c.b16 %v414, %v412
      %v421 = vpack.c.b16 %v415, %v413
      %v422 = vpack.c.b16 %v418, %v416
      %v423 = vpack.c.b16 %v419, %v417
      %v429 = vsel %vm317, %v407, 0
      %431 = vmatprep.subr.bf16.mxu0 %v421
      %432 = vmatpush1.bf16.msra.mxu0 %v420
      %433 = vmatprep.subr.bf16.mxu0 %v423
      %434 = vmatpush1.bf16.msra.mxu0 %v422
      %435 = vmatprep.subr.bf16.mxu0 0
      %436 = vmatpush1.bf16.msra.mxu0 0
      %437 = vmatprep.subr.bf16.mxu0 0
      %438 = vmatpush1.bf16.msra.mxu0 0
      %439 = vmatprep.subr.bf16.mxu0 0
      %440 = vmatpush1.bf16.msra.mxu0 0
      %441 = vmatprep.subr.bf16.mxu0 0
      %442 = vmatpush1.bf16.msra.mxu0 0
      %443 = vmatprep.subr.bf16.mxu0 0
      %444 = vmatpush1.bf16.msra.mxu0 0
      %445 = vmatprep.subr.bf16.mxu0 0
      %446 = vmatpush1.bf16.msra.mxu0 0
      %447 = vmatprep.subr.bf16.mxu0 0
      %448 = vmatpush1.bf16.msra.mxu0 0
      %449 = vmatprep.subr.bf16.mxu0 0
      %450 = vmatpush1.bf16.msra.mxu0 0
      %451 = vmatprep.subr.bf16.mxu0 0
      %452 = vmatpush1.bf16.msra.mxu0 0
      %453 = vmatprep.subr.bf16.mxu0 0
      %454 = vmatpush1.bf16.msra.mxu0 0
      %455 = vmatprep.subr.bf16.mxu0 0
      %456 = vmatpush1.bf16.msra.mxu0 0
      %457 = vmatprep.subr.bf16.mxu0 0
      %458 = vmatpush1.bf16.msra.mxu0 0
      %459 = vmatprep.subr.bf16.mxu0 0
      %460 = vmatpush1.bf16.msra.mxu0 0
      %461 = vmatprep.subr.bf16.mxu0 0
      %462 = vmatpush1.bf16.msra.mxu0 0
      %463 = vmatprep.mubr.bf16.mxu0 0
      %464 = vmatmul.mubr.bf16.gmra.mrb[0].mxu0 %v429
      %v465 = vpop.f32.mrb[0].mxu0
      %v466 = vadd.f32 %v365, %v465
      %v467 = vpop.f32.mrb[0].mxu0
      %v468 = vadd.f32 %v367, %v467
      %v469 = vpop.f32.mrb[0].mxu0
      %v470 = vadd.f32 %v369, %v469
      %v471 = vpop.f32.mrb[0].mxu0
      %v472 = vadd.f32 %v371, %v471
      %473 = vmatprep.mubr.bf16.mxu0 0
      %474 = vmatmul.mubr.bf16.gmra.mrb[0].mxu0 %v319
      %v475 = vpop.f32.mrb[0].mxu0
      %v476 = vadd.f32 %v375, %v475
      %v477 = vpop.f32.mrb[0].mxu0
      %v478 = vadd.f32 %v377, %v477
      %v479 = vpop.f32.mrb[0].mxu0
      %v480 = vadd.f32 %v379, %v479
      %v481 = vpop.f32.mrb[0].mxu0
      %v482 = vadd.f32 %v381, %v481
      %483 = vmatprep.mubr.bf16.mxu0 0
      %484 = vmatmul.mubr.bf16.gmra.mrb[0].mxu0 %v322
      %v485 = vpop.f32.mrb[0].mxu0
      %v486 = vadd.f32 %v385, %v485
      %v487 = vpop.f32.mrb[0].mxu0
      %v488 = vadd.f32 %v387, %v487
      %v489 = vpop.f32.mrb[0].mxu0
      %v490 = vadd.f32 %v389, %v489
      %v491 = vpop.f32.mrb[0].mxu0
      %v492 = vadd.f32 %v391, %v491
      %493 = vmatprep.mubr.bf16.mxu0 0
      %494 = vmatmul.mubr.bf16.gmra.mrb[0].mxu0 %v325
      %v495 = vpop.f32.mrb[0].mxu0
      %v496 = vadd.f32 %v395, %v495
      %v497 = vpop.f32.mrb[0].mxu0
      %v498 = vadd.f32 %v397, %v497
      %v499 = vpop.f32.mrb[0].mxu0
      %v500 = vadd.f32 %v399, %v499
      %v501 = vpop.f32.mrb[0].mxu0
      %v502 = vadd.f32 %v401, %v501
      %503 = vdwg.mxu0
      %vm512 = vcmask 1046528
      %v513 = vrot.slane %v468, 1
      %v514 = vrot.slane %v472, 1
      %v515 = vsel %vm512, %v513, %v514
      %v516 = vrot.slane %v478, 1
      %v517 = vsel %vm512, %v514, %v516
      %v518 = vrot.slane %v482, 1
      %v519 = vsel %vm512, %v516, %v518
      %v520 = vrot.slane %v488, 1
      %v521 = vsel %vm512, %v518, %v520
      %v522 = vrot.slane %v492, 1
      %v523 = vsel %vm512, %v520, %v522
      %v524 = vrot.slane %v498, 1
      %v525 = vsel %vm512, %v522, %v524
      %v526 = vrot.slane %v502, 1
      %v527 = vsel %vm512, %v524, %v526
      %v536 = vsel %vm512, %v526, 0.0
      %v537 = vadd.f32 %v466, %v515
      %v538 = vadd.f32 %v470, %v517
      %v539 = vadd.f32 %v476, %v519
      %v540 = vadd.f32 %v480, %v521
      %v541 = vadd.f32 %v486, %v523
      %v542 = vadd.f32 %v490, %v525
      %v543 = vadd.f32 %v496, %v527
      %v544 = vadd.f32 %v500, %v536
      %v545 = vld [vmem:[%s2] sm:$0x1]
      %v547 = vlaneseq
      %v548 = vshrl.u32 %v547, 7
      %v549 = vsub.s32 0, %v548
      %v550 = vrot.slane %v545, %v549
      %v552 = vadd.f32 %v537, %v550
      %v553 = vadd.f32 %v538, %v550
      %v554 = vadd.f32 %v539, %v550
      %v555 = vadd.f32 %v540, %v550
      %v556 = vadd.f32 %v541, %v550
      %v557 = vadd.f32 %v542, %v550
      %v558 = vadd.f32 %v543, %v550
      %v559 = vadd.f32 %v544, %v550
      %v560 = vmax.f32 %v552, 0.0
      %v561 = vmax.f32 %v553, 0.0
      %v562 = vmax.f32 %v554, 0.0
      %v563 = vmax.f32 %v555, 0.0
      %v564 = vmax.f32 %v556, 0.0
      %v565 = vmax.f32 %v557, 0.0
      %v566 = vmax.f32 %v558, 0.0
      %v567 = vmax.f32 %v559, 0.0
      %v568 = vld [vmem:[%s245] sm:$0xff]
      %v569 = vld [vmem:[%s245 + $0x8] sm:$0xff]
      %v570 = vld [vmem:[%s245 + $0x10] sm:$0xff]
      %v571 = vld [vmem:[%s245 + $0x18] sm:$0xff]
      %v572 = vld [vmem:[%s245 + $0x20] sm:$0xff]
      %v573 = vld [vmem:[%s245 + $0x28] sm:$0xff]
      %v574 = vld [vmem:[%s245 + $0x30] sm:$0xff]
      %v575 = vld [vmem:[%s245 + $0x38] sm:$0xff]
      %577 = vset.pattern.permute.xlu0 0
      %578 = vperm.xlu0 %577, %v568
      %v579 = vpop.permute.xlu0 %578
      %582 = vset.pattern.permute.xlu0 0
      %583 = vperm.xlu0 %582, %v569
      %v584 = vpop.permute.xlu0 %583
      %587 = vset.pattern.permute.xlu0 0
      %588 = vperm.xlu0 %587, %v570
      %v589 = vpop.permute.xlu0 %588
      %592 = vset.pattern.permute.xlu0 0
      %593 = vperm.xlu0 %592, %v571
      %v594 = vpop.permute.xlu0 %593
      %597 = vset.pattern.permute.xlu0 0
      %598 = vperm.xlu0 %597, %v572
      %v599 = vpop.permute.xlu0 %598
      %602 = vset.pattern.permute.xlu0 0
      %603 = vperm.xlu0 %602, %v573
      %v604 = vpop.permute.xlu0 %603
      %607 = vset.pattern.permute.xlu0 0
      %608 = vperm.xlu0 %607, %v574
      %v609 = vpop.permute.xlu0 %608
      %612 = vset.pattern.permute.xlu0 0
      %613 = vperm.xlu0 %612, %v575
      %v614 = vpop.permute.xlu0 %613
      %v616 = vmul.f32 %v560, %v579
      %v617 = vmul.f32 %v561, %v584
      %v618 = vmul.f32 %v562, %v589
      %v619 = vmul.f32 %v563, %v594
      %v620 = vmul.f32 %v564, %v599
      %v621 = vmul.f32 %v565, %v604
      %v622 = vmul.f32 %v566, %v609
      %v623 = vmul.f32 %v567, %v614
      %v624 = vpack.c.bf16 %v617, %v616
      %v625 = vpack.c.bf16 %v619, %v618
      %v626 = vpack.c.bf16 %v621, %v620
      %v627 = vpack.c.bf16 %v623, %v622
      %v632 = vunpack.c.l.b16 %v624
      %v633 = vunpack.c.h.b16 %v624
      %v634 = vunpack.c.l.b16 %v625
      %v635 = vunpack.c.h.b16 %v625
      %v636 = vunpack.c.l.b16 %v626
      %v637 = vunpack.c.h.b16 %v626
      %v638 = vunpack.c.l.b16 %v627
      %v639 = vunpack.c.h.b16 %v627
      %v640 = vpack.c.b16 %v632, %v632
      %v641 = vpack.c.b16 %v633, %v633
      %v642 = vpack.c.b16 %v634, %v634
      %v643 = vpack.c.b16 %v635, %v635
      %v644 = vpack.c.b16 %v636, %v636
      %v645 = vpack.c.b16 %v637, %v637
      %v646 = vpack.c.b16 %v638, %v638
      %v647 = vpack.c.b16 %v639, %v639
      %656 = vst [vmem:[%s255] sm:$0xf] %v640
      %657 = vst [vmem:[%s255 + $0x4] sm:$0xf] %v641
      %658 = vst [vmem:[%s255 + $0x8] sm:$0xf] %v642
      %659 = vst [vmem:[%s255 + $0xc] sm:$0xf] %v643
      %660 = vst [vmem:[%s255 + $0x10] sm:$0xf] %v644
      %661 = vst [vmem:[%s255 + $0x14] sm:$0xf] %v645
      %662 = vst [vmem:[%s255 + $0x18] sm:$0xf] %v646
      %663 = vst [vmem:[%s255 + $0x1c] sm:$0xf] %v647
      %s664 = smul.u32 8, %s20
      %p665 = scmp.lt.s32.totalorder %s19, 1
      %s666 = scalar_select %p665, %s19, 1
      %p667 = scmp.lt.s32.totalorder %s664, 7
      %s668 = scalar_select %p667, %s664, 7
      %s669 = smul.addr %s666, 8
      %s670 = sadd.s32 %s668, %s669
      %s671 = smul.addr %s670, 4
      %s672 = scalar_lea.vmem %s4, %s671
      // Predicated region
      $region37: #{_forward.3} parent=35 // pred_check
        %p673 = pneg %p143
      $region38: #{_forward.3} parent=35 // pred_check_branch
        %675 = sbr.rel (%p673) target = $region40
      $region39: #{_forward.3} parent=35 // pred_region
        %s676 = smul.u32 8, %s20
      $region40: #{_forward.3} parent=35 // pred_fallthru
        _
    $region36: #{_forward.3} parent=5 // pred_fallthru
      _
    %p677 = scmp.le.s32.totalorder 2, %s10
    // Predicated region
    $region41: #{_forward.3} parent=5 // pred_check
      %p678 = pneg %p677
    $region42: #{_forward.3} parent=5 // pred_check_branch
      %680 = sbr.rel (%p678) target = $region44
    $region43: #{_forward.3} parent=5 // pred_region
      %s681 = ssub.s32 %s10, 2
      // Predicated region
      $region45: #{_forward.3} parent=43 // pred_check
        %p682 = pneg %p149
      $region46: #{_forward.3} parent=43 // pred_check_branch
        %684 = sbr.rel (%p682) target = $region48
      $region47: #{_forward.3} parent=43 // pred_region
        %s685 = smul.u32 8, %s22
        %p686 = scmp.lt.s32.totalorder %s21, 1
        %s687 = scalar_select %p686, %s21, 1
        %p688 = scmp.lt.s32.totalorder %s685, 7
        %s689 = scalar_select %p688, %s685, 7
        %s690 = smul.addr %s687, 8
        %s691 = sadd.s32 %s689, %s690
        %s692 = smul.addr %s691, 4
        %s693 = scalar_lea.vmem %s4, %s692
      $region48: #{_forward.3} parent=43 // pred_fallthru
        _
    $region44: #{_forward.3} parent=5 // pred_fallthru
      _
  $region6: #{_forward.3} parent=0 // loop_footer
    %s14 = sadd.s32 1, %s10
  $region7: #{_forward.3} parent=0 // loop_footer_branch
    %9 = sbr.rel target = $region3
  $region8: #{_forward.3} parent=0 // loop_exit
    _

</llo_original>
